<compile_context>
chip_gen: v5e
topology: v5e:2x2
jax: 0.10.0
libtpu: 0.0.40
codegen_flags: <defaults>
</compile_context>

<pallas_src>
import math

import numpy as np
import jax
import jax.numpy as jnp
from jax import lax
from jax.experimental import pallas as pl
from jax.experimental.pallas import tpu as pltpu

F32 = jnp.float32
BF16 = jnp.bfloat16


def _layer_norm(x, gamma, beta, eps=1e-5):
    # torch.nn.LayerNorm semantics: biased variance, eps=1e-5, affine.
    mu = jnp.mean(x, axis=-1, keepdims=True)
    var = jnp.mean((x - mu) ** 2, axis=-1, keepdims=True)
    return (x - mu) * lax.rsqrt(var + eps) * gamma + beta


def _mm(a, w):
    # MXU matmul: bf16 operands, f32 accumulation (used by the reference).
    return jnp.dot(a.astype(BF16), w.astype(BF16), preferred_element_type=F32)


def _vmem_cap_bytes():
    try:
        info = pltpu.get_tpu_info()
        return int(getattr(info, "vmem_capacity_bytes", 64 << 20))
    except Exception:
        return 64 << 20          # conservative fallback (v7x-sized)


# --------------------------------------------------------------------------
# Kernel 1: transformer encoder (embedding LayerNorm + L encoder layers).
# Grid = (num_layers,), weights streamed per layer, activations in scratch.
# --------------------------------------------------------------------------
def _make_encoder_kernel(B, S, E, num_heads):
    H = num_heads
    Dh = E // H
    BS = B * S
    inv_scale = 1.0 / math.sqrt(Dh)

    def kernel(x_hbm, eg_ref, eb_ref,
               wqkv_ref, bqkv_ref, wo_ref, bo_ref,
               w1_ref, b1_ref, w2_ref, b2_ref,
               g1_ref, be1_ref, g2_ref, be2_ref,
               o_ref,
               x_state, copy_sem):
        l = pl.program_id(0)

        # Layer 0: one-shot DMA of the (token+pos) embedding slab from HBM
        # into the VMEM activation scratch (the input is NOT held resident
        # for the remaining layers), then embedding LayerNorm.
        @pl.when(l == 0)
        def _():
            cp = pltpu.make_async_copy(x_hbm, x_state, copy_sem.at[0])
            cp.start()
            cp.wait()
            x_state[...] = _layer_norm(x_state[...], eg_ref[...], eb_ref[...])

        x = x_state[...]                                   # (BS, E) f32
        xb = x.astype(BF16)                                # cast once per layer

        # ---- fused QKV projection: one (BS,E)@(E,3E) MXU matmul ----
        qkv = jnp.dot(xb, wqkv_ref[0],
                      preferred_element_type=F32) + bqkv_ref[0]   # (BS, 3E)

        # ---- batched multi-head attention over a single (H*B) batch dim ----
        def split_heads(col0):                             # -> (H*B, S, Dh) bf16
            return jnp.concatenate(
                [qkv[:, col0 + h * Dh: col0 + (h + 1) * Dh].reshape(B, S, Dh)
                 for h in range(H)], axis=0).astype(BF16)

        qh = split_heads(0)
        kh = split_heads(E)
        vh = split_heads(2 * E)

        s = jnp.einsum('nqd,nkd->nqk', qh, kh,
                       preferred_element_type=F32) * inv_scale
        s = s - jnp.max(s, axis=-1, keepdims=True)
        p = jnp.exp(s)
        p = p / jnp.sum(p, axis=-1, keepdims=True)         # exact softmax
        ctx = jnp.einsum('nqk,nkd->nqd', p.astype(BF16), vh,
                         preferred_element_type=F32)       # (H*B, S, Dh)

        # ---- out projection: accumulate each head's context directly through
        # the matching Dh rows of Wo (== ctx_full @ Wo; no context slab, no
        # Dh-wide masked sub-stores) ----
        wo = wo_ref[0]                                     # (E, E) bf16
        attn_out = bo_ref[0] + jnp.dot(
            ctx[0:B].reshape(BS, Dh).astype(BF16), wo[0:Dh, :],
            preferred_element_type=F32)
        for h in range(1, H):
            attn_out = attn_out + jnp.dot(
                ctx[h * B:(h + 1) * B].reshape(BS, Dh).astype(BF16),
                wo[h * Dh:(h + 1) * Dh, :], preferred_element_type=F32)

        x = _layer_norm(x + attn_out, g1_ref[0], be1_ref[0])

        # ---- feed forward ----
        xb = x.astype(BF16)
        h1 = jnp.maximum(
            jnp.dot(xb, w1_ref[0], preferred_element_type=F32) + b1_ref[0], 0.0)
        ff = jnp.dot(h1.astype(BF16), w2_ref[0],
                     preferred_element_type=F32) + b2_ref[0]
        x = _layer_norm(x + ff, g2_ref[0], be2_ref[0])

        x_state[...] = x

        @pl.when(l == pl.num_programs(0) - 1)
        def _():
            o_ref[...] = x

    return kernel


def transformer_encoder(x2d, p, wqkv, bqkv, num_heads, B, S):
    BS, E = x2d.shape
    L = wqkv.shape[0]
    F = p['w1'].shape[2]

    def wspec(shape):      # per-layer blocks: stream one layer at a time
        return pl.BlockSpec((1,) + tuple(shape[1:]), lambda l: (l, 0, 0))

    in_specs = [
        pl.BlockSpec(memory_space=pl.ANY),                  # embeddings (HBM)
        pl.BlockSpec((1, E), lambda l: (0, 0)),             # embedding LN gamma
        pl.BlockSpec((1, E), lambda l: (0, 0)),             # embedding LN beta
        wspec(wqkv.shape), wspec(bqkv.shape),
        wspec(p['wo'].shape), wspec(p['bo'].shape),
        wspec(p['w1'].shape), wspec(p['b1'].shape),
        wspec(p['w2'].shape), wspec(p['b2'].shape),
        wspec(p['g1'].shape), wspec(p['be1'].shape),
        wspec(p['g2'].shape), wspec(p['be2'].shape),
    ]

    # VMEM budget: double-buffered bf16 layer weights + activation slabs +
    # attention scores + compiler headroom, capped by physical VMEM.
    vmem_cap = _vmem_cap_bytes()
    layer_w_bytes = 2 * (3 * E * E + E * E + 2 * E * F)     # bf16 per layer
    est = (4 * layer_w_bytes                                # 2x buffers + margin
           + 2 * 4 * BS * E                                 # x_state + out block
           + 8 * 4 * BS * max(E, F)                         # matmul temporaries
           + 8 * num_heads * B * S * S                      # scores / probs
           + (12 << 20))                                    # compiler scratch
    vmem_limit = int(max(min(est, vmem_cap - (16 << 20)), 32 << 20))

    kernel = _make_encoder_kernel(B, S, E, num_heads)
    return pl.pallas_call(
        kernel,
        out_shape=jax.ShapeDtypeStruct((BS, E), F32),
        grid_spec=pltpu.PrefetchScalarGridSpec(
            num_scalar_prefetch=0,
            grid=(L,),
            in_specs=in_specs,
            out_specs=pl.BlockSpec((BS, E), lambda l: (0, 0)),
            scratch_shapes=[pltpu.VMEM((BS, E), F32),        # running activation
                            pltpu.SemaphoreType.DMA((1,))],  # embedding copy
        ),
        compiler_params=pltpu.CompilerParams(
            dimension_semantics=("arbitrary",),              # layers sequential
            vmem_limit_bytes=vmem_limit),
    )(x2d, p['emb_g'], p['emb_b'],
      wqkv, bqkv, p['wo'], p['bo'],
      p['w1'], p['b1'], p['w2'], p['b2'],
      p['g1'], p['be1'], p['g2'], p['be2'])


# --------------------------------------------------------------------------
# Kernel 2: output (vocab) projection.
# Grid = (vocab_tiles, row_tiles): the (E, tile_v) weight tile is streamed
# from HBM once and stays resident while the activation row tiles cycle.
# --------------------------------------------------------------------------
def _out_proj_kernel(h_ref, w_ref, b_ref, o_ref):
    o_ref[...] = (jnp.dot(h_ref[...].astype(BF16), w_ref[...],
                          preferred_element_type=F32) + b_ref[...])


def output_projection(h2, ow, ob, *, tile_v=None, tile_m=None):
    BS, E = h2.shape
    V = ow.shape[1]
    if tile_v is None:                 # largest lane-dense vocab tile
        tile_v = V
        for t in (2048, 1024, 512, 256, 128):
            if V % t == 0:
                tile_v = t
                break
    if tile_m is None:                 # cap row tiles; cdiv handles ragged BS
        tile_m = BS if BS <= 512 else 256

    vmem_cap = _vmem_cap_bytes()
    est = (2 * (tile_m * E * 4 + E * tile_v * 2 + tile_v * 4 + tile_m * tile_v * 4)
           + (12 << 20))
    vmem_limit = int(max(min(est, vmem_cap - (16 << 20)), 32 << 20))

    return pl.pallas_call(
        _out_proj_kernel,
        out_shape=jax.ShapeDtypeStruct((BS, V), F32),
        grid_spec=pltpu.PrefetchScalarGridSpec(
            num_scalar_prefetch=0,
            grid=(pl.cdiv(V, tile_v), pl.cdiv(BS, tile_m)),
            in_specs=[pl.BlockSpec((tile_m, E), lambda j, i: (i, 0)),
                      pl.BlockSpec((E, tile_v), lambda j, i: (0, j)),
                      pl.BlockSpec((1, tile_v), lambda j, i: (0, j))],
            out_specs=pl.BlockSpec((tile_m, tile_v), lambda j, i: (i, j)),
        ),
        compiler_params=pltpu.CompilerParams(
            dimension_semantics=("parallel", "parallel"),
            vmem_limit_bytes=vmem_limit),
    )(h2, ow, ob)


# --------------------------------------------------------------------------
# Full forward
# --------------------------------------------------------------------------
def language_model_forward(token_ids, params, num_heads):
    B, S = token_ids.shape
    E = params['tok_emb'].shape[1]
    V = params['ow'].shape[1]
    assert E % num_heads == 0

    # Embedding gather + positional add is JAX glue (irregular gather);
    # everything else runs in the Pallas kernels.
    x = (params['tok_emb'][token_ids]
         + params['pos_emb'][jnp.arange(S)][None, :, :]).astype(F32)
    x2d = x.reshape(B * S, E)

    # Fuse Q|K|V weights/biases (in production this is done once at load time).
    wqkv = jnp.concatenate([params['wq'], params['wk'], params['wv']], axis=2)
    bqkv = jnp.concatenate([params['bq'], params['bk'], params['bv']], axis=2)

    h = transformer_encoder(x2d, params, wqkv, bqkv, num_heads, B, S)  # (BS, E)
    logits = output_projection(h, params['ow'], params['ob'])          # (BS, V)
    return logits.reshape(B, S, V)


# --------------------------------------------------------------------------
# Pure-JAX reference mirroring the PyTorch module (same bf16 matmul operands).
# --------------------------------------------------------------------------
def reference_forward(token_ids, params, num_heads):
    p = params
    B, S = token_ids.shape
    x = p['tok_emb'][token_ids] + p['pos_emb'][jnp.arange(S)][None]
    x = _layer_norm(x.astype(F32), p['emb_g'], p['emb_b'])
    E = x.shape[-1]
    H, Dh = num_heads, E // num_heads
    L = p['wq'].shape[0]
    inv_scale = 1.0 / math.sqrt(Dh)
    for l in range(L):
        q = _mm(x, p['wq'][l]) + p['bq'][l]
        k = _mm(x, p['wk'][l]) + p['bk'][l]
        v = _mm(x, p['wv'][l]) + p['bv'][l]
        split = lambda t: t.reshape(B, S, H, Dh).transpose(0, 2, 1, 3).astype(BF16)
        qh, kh, vh = split(q), split(k), split(v)
        s = jnp.einsum('bhqd,bhkd->bhqk', qh, kh,
                       preferred_element_type=F32) * inv_scale
        attn = jax.nn.softmax(s, axis=-1)
        ctx = jnp.einsum('bhqk,bhkd->bhqd', attn.astype(BF16), vh,
                         preferred_element_type=F32)
        ctx = ctx.transpose(0, 2, 1, 3).reshape(B, S, E)
        attn_out = _mm(ctx, p['wo'][l]) + p['bo'][l]
        x = _layer_norm(x + attn_out, p['g1'][l], p['be1'][l])
        h1 = jnp.maximum(_mm(x, p['w1'][l]) + p['b1'][l], 0.0)
        ff = _mm(h1, p['w2'][l]) + p['b2'][l]
        x = _layer_norm(x + ff, p['g2'][l], p['be2'][l])
    return _mm(x, p['ow']) + p['ob']


def init_params(key, vocab_size, embed_dim, max_seq_len, ff_dim, num_layers):
    ks = jax.random.split(key, 16)
    std = 0.02
    L, E, F, V = num_layers, embed_dim, ff_dim, vocab_size
    nrm = lambda k, shape: jax.random.normal(k, shape, F32) * std
    return dict(
        tok_emb=nrm(ks[0], (V, E)),
        pos_emb=nrm(ks[1], (max_seq_len, E)),
        emb_g=jnp.ones((1, E), F32), emb_b=jnp.zeros((1, E), F32),
        wq=nrm(ks[2], (L, E, E)).astype(BF16), bq=nrm(ks[3], (L, 1, E)),
        wk=nrm(ks[4], (L, E, E)).astype(BF16), bk=nrm(ks[5], (L, 1, E)),
        wv=nrm(ks[6], (L, E, E)).astype(BF16), bv=nrm(ks[7], (L, 1, E)),
        wo=nrm(ks[8], (L, E, E)).astype(BF16), bo=nrm(ks[9], (L, 1, E)),
        w1=nrm(ks[10], (L, E, F)).astype(BF16), b1=nrm(ks[11], (L, 1, F)),
        w2=nrm(ks[12], (L, F, E)).astype(BF16), b2=nrm(ks[13], (L, 1, E)),
        g1=jnp.ones((L, 1, E), F32), be1=jnp.zeros((L, 1, E), F32),
        g2=jnp.ones((L, 1, E), F32), be2=jnp.zeros((L, 1, E), F32),
        ow=nrm(ks[14], (E, V)).astype(BF16), ob=nrm(ks[15], (1, V)),
    )


if __name__ == "__main__":
    # small config consistent with the module's constructor
    vocab_size, embed_dim, max_seq_len = 1024, 32, 16
    num_heads, ff_dim, num_layers = 4, 64, 2
    B, S = 2, 8

    key = jax.random.PRNGKey(0)
    pkey, dkey = jax.random.split(key)
    params = init_params(pkey, vocab_size, embed_dim, max_seq_len, ff_dim, num_layers)
    token_ids = jax.random.randint(dkey, (B, S), 0, vocab_size, dtype=jnp.int32)

    logits = jax.block_until_ready(
        language_model_forward(token_ids, params, num_heads))
    assert logits.shape == (B, S, vocab_size)
    assert logits.dtype == jnp.float32

    ref = jax.block_until_ready(reference_forward(token_ids, params, num_heads))
    np.testing.assert_allclose(np.asarray(logits), np.asarray(ref),
                               rtol=1e-2, atol=2e-3)

    print("KERNEL_OK")
</pallas_src>

<mosaic_0001>
module attributes {stable_mosaic.version = 11 : i64} {
  func.func @kernel(%arg0: i32, %arg1: memref<16x32xf32, #tpu.memory_space<any>>, %arg2: memref<1x32xf32, #tpu.memory_space<vmem>>, %arg3: memref<1x32xf32, #tpu.memory_space<vmem>>, %arg4: memref<1x32x96xbf16, #tpu.memory_space<vmem>>, %arg5: memref<1x1x96xf32, #tpu.memory_space<vmem>>, %arg6: memref<1x32x32xbf16, #tpu.memory_space<vmem>>, %arg7: memref<1x1x32xf32, #tpu.memory_space<vmem>>, %arg8: memref<1x32x64xbf16, #tpu.memory_space<vmem>>, %arg9: memref<1x1x64xf32, #tpu.memory_space<vmem>>, %arg10: memref<1x64x32xbf16, #tpu.memory_space<vmem>>, %arg11: memref<1x1x32xf32, #tpu.memory_space<vmem>>, %arg12: memref<1x1x32xf32, #tpu.memory_space<vmem>>, %arg13: memref<1x1x32xf32, #tpu.memory_space<vmem>>, %arg14: memref<1x1x32xf32, #tpu.memory_space<vmem>>, %arg15: memref<1x1x32xf32, #tpu.memory_space<vmem>>, %arg16: memref<16x32xf32, #tpu.memory_space<vmem>>, %arg17: memref<16x32xf32, #tpu.memory_space<vmem>>, %arg18: memref<1x!tpu.dma_semaphore, #tpu.memory_space<semaphore_mem>>) attributes {dimension_semantics = [#tpu.dimension_semantics<arbitrary>], iteration_bounds = array<i64: 2>, scalar_prefetch = 0 : i64, scratch_operands = 2 : i64, tpu.core_type = #tpu.core_type<tc>, window_params = [{}, {pipeline_mode = #tpu.pipeline_mode<synchronous>, transform_indices = @transform_1, window_bounds = array<i64: 1, 32>}, {pipeline_mode = #tpu.pipeline_mode<synchronous>, transform_indices = @transform_2, window_bounds = array<i64: 1, 32>}, {transform_indices = @transform_3, window_bounds = array<i64: 1, 32, 96>}, {transform_indices = @transform_4, window_bounds = array<i64: 1, 1, 96>}, {transform_indices = @transform_5, window_bounds = array<i64: 1, 32, 32>}, {transform_indices = @transform_6, window_bounds = array<i64: 1, 1, 32>}, {transform_indices = @transform_7, window_bounds = array<i64: 1, 32, 64>}, {transform_indices = @transform_8, window_bounds = array<i64: 1, 1, 64>}, {transform_indices = @transform_9, window_bounds = array<i64: 1, 64, 32>}, {transform_indices = @transform_10, window_bounds = array<i64: 1, 1, 32>}, {transform_indices = @transform_11, window_bounds = array<i64: 1, 1, 32>}, {transform_indices = @transform_12, window_bounds = array<i64: 1, 1, 32>}, {transform_indices = @transform_13, window_bounds = array<i64: 1, 1, 32>}, {transform_indices = @transform_14, window_bounds = array<i64: 1, 1, 32>}, {pipeline_mode = #tpu.pipeline_mode<synchronous>, transform_indices = @transform_15, window_bounds = array<i64: 16, 32>}]} {
    %c0_i32 = arith.constant 0 : i32
    %0 = arith.cmpi eq, %arg0, %c0_i32 : i32
    %1 = arith.extui %0 : i1 to i32
    %c0_i32_0 = arith.constant 0 : i32
    %2 = arith.cmpi ne, %1, %c0_i32_0 : i32
    scf.if %2 {
      %c0_i32_63 = arith.constant 0 : i32
      %161 = tpu.memref_slice %arg18[%c0_i32_63] : memref<1x!tpu.dma_semaphore, #tpu.memory_space<semaphore_mem>> -> memref<1x!tpu.dma_semaphore, #tpu.memory_space<semaphore_mem>>
      %162 = tpu.memref_squeeze %161 : memref<1x!tpu.dma_semaphore, #tpu.memory_space<semaphore_mem>> -> memref<!tpu.dma_semaphore, #tpu.memory_space<semaphore_mem>>
      tpu.enqueue_dma source(%arg1 : memref<16x32xf32, #tpu.memory_space<any>>) target(%arg17 : memref<16x32xf32, #tpu.memory_space<vmem>>) target_semaphore(%162 : memref<!tpu.dma_semaphore, #tpu.memory_space<semaphore_mem>>)
      %c0_i32_64 = arith.constant 0 : i32
      %163 = tpu.memref_slice %arg18[%c0_i32_64] : memref<1x!tpu.dma_semaphore, #tpu.memory_space<semaphore_mem>> -> memref<1x!tpu.dma_semaphore, #tpu.memory_space<semaphore_mem>>
      %164 = tpu.memref_squeeze %163 : memref<1x!tpu.dma_semaphore, #tpu.memory_space<semaphore_mem>> -> memref<!tpu.dma_semaphore, #tpu.memory_space<semaphore_mem>>
      tpu.wait_dma2 semaphore(%164 : memref<!tpu.dma_semaphore, #tpu.memory_space<semaphore_mem>>) src(%arg1 : memref<16x32xf32, #tpu.memory_space<any>>) dst(%arg17 : memref<16x32xf32, #tpu.memory_space<vmem>>)
      %c0_65 = arith.constant 0 : index
      %c0_66 = arith.constant 0 : index
      %165 = vector.load %arg17[%c0_65, %c0_66] : memref<16x32xf32, #tpu.memory_space<vmem>>, vector<16x32xf32>
      %c0_67 = arith.constant 0 : index
      %c0_68 = arith.constant 0 : index
      %166 = vector.load %arg2[%c0_67, %c0_68] : memref<1x32xf32, #tpu.memory_space<vmem>>, vector<1x32xf32>
      %c0_69 = arith.constant 0 : index
      %c0_70 = arith.constant 0 : index
      %167 = vector.load %arg3[%c0_69, %c0_70] : memref<1x32xf32, #tpu.memory_space<vmem>>, vector<1x32xf32>
      %cst_71 = arith.constant dense<0.000000e+00> : vector<16xf32>
      %168 = vector.multi_reduction <add>, %165, %cst_71 [1] : vector<16x32xf32> to vector<16xf32>
      %169 = vector.shape_cast %168 : vector<16xf32> to vector<16x1xf32>
      %cst_72 = arith.constant 3.200000e+01 : f32
      %170 = vector.broadcast %cst_72 : f32 to vector<16x1xf32>
      %171 = arith.divf %169, %170 : vector<16x1xf32>
      %172 = vector.broadcast %171 : vector<16x1xf32> to vector<16x32xf32>
      %173 = arith.subf %165, %172 : vector<16x32xf32>
      %174 = arith.mulf %173, %173 : vector<16x32xf32>
      %cst_73 = arith.constant dense<0.000000e+00> : vector<16xf32>
      %175 = vector.multi_reduction <add>, %174, %cst_73 [1] : vector<16x32xf32> to vector<16xf32>
      %176 = vector.shape_cast %175 : vector<16xf32> to vector<16x1xf32>
      %cst_74 = arith.constant 3.200000e+01 : f32
      %177 = vector.broadcast %cst_74 : f32 to vector<16x1xf32>
      %178 = arith.divf %176, %177 : vector<16x1xf32>
      %179 = vector.broadcast %171 : vector<16x1xf32> to vector<16x32xf32>
      %180 = arith.subf %165, %179 : vector<16x32xf32>
      %cst_75 = arith.constant 9.99999974E-6 : f32
      %181 = vector.broadcast %cst_75 : f32 to vector<16x1xf32>
      %182 = arith.addf %178, %181 : vector<16x1xf32>
      %183 = math.rsqrt %182 : vector<16x1xf32>
      %184 = vector.broadcast %183 : vector<16x1xf32> to vector<16x32xf32>
      %185 = arith.mulf %180, %184 : vector<16x32xf32>
      %186 = vector.broadcast %166 : vector<1x32xf32> to vector<16x32xf32>
      %187 = arith.mulf %185, %186 : vector<16x32xf32>
      %188 = vector.broadcast %167 : vector<1x32xf32> to vector<16x32xf32>
      %189 = arith.addf %187, %188 : vector<16x32xf32>
      %c0_76 = arith.constant 0 : index
      %c0_77 = arith.constant 0 : index
      %190 = vector.load %arg17[%c0_76, %c0_77] : memref<16x32xf32, #tpu.memory_space<vmem>>, vector<16x32xf32>
      tpu.vector_store %arg17[%c0_76, %c0_77], %189 {strides = array<i32>} : memref<16x32xf32, #tpu.memory_space<vmem>>, vector<16x32xf32>,
    } else {
    }
    %c0 = arith.constant 0 : index
    %c0_1 = arith.constant 0 : index
    %3 = vector.load %arg17[%c0, %c0_1] : memref<16x32xf32, #tpu.memory_space<vmem>>, vector<16x32xf32>
    %4 = arith.truncf %3 : vector<16x32xf32> to vector<16x32xbf16>
    %c0_2 = arith.constant 0 : index
    %c0_3 = arith.constant 0 : index
    %c0_4 = arith.constant 0 : index
    %5 = vector.load %arg4[%c0_2, %c0_3, %c0_4] : memref<1x32x96xbf16, #tpu.memory_space<vmem>>, vector<1x32x96xbf16>
    %6 = vector.shape_cast %5 : vector<1x32x96xbf16> to vector<32x96xbf16>
    %cst = arith.constant dense<0.000000e+00> : vector<16x96xf32>
    %7 = tpu.matmul %4, %6, %cst {dimension_numbers = #tpu.dot_dimension_numbers<[1], [0], [0], [1], [0, 0, 1, 1], [], []>} : vector<16x32xbf16>, vector<32x96xbf16>, vector<16x96xf32> -> vector<16x96xf32>
    %c0_5 = arith.constant 0 : index
    %c0_6 = arith.constant 0 : index
    %c0_7 = arith.constant 0 : index
    %8 = vector.load %arg5[%c0_5, %c0_6, %c0_7] : memref<1x1x96xf32, #tpu.memory_space<vmem>>, vector<1x1x96xf32>
    %9 = vector.shape_cast %8 : vector<1x1x96xf32> to vector<1x96xf32>
    %10 = vector.broadcast %9 : vector<1x96xf32> to vector<16x96xf32>
    %11 = arith.addf %7, %10 : vector<16x96xf32>
    %12 = vector.extract_strided_slice %11 {offsets = [0, 0], sizes = [16, 8], strides = [1, 1]} : vector<16x96xf32> to vector<16x8xf32>
    %13 = vector.shape_cast %12 : vector<16x8xf32> to vector<2x8x8xf32>
    %14 = vector.extract_strided_slice %11 {offsets = [0, 8], sizes = [16, 8], strides = [1, 1]} : vector<16x96xf32> to vector<16x8xf32>
    %15 = vector.shape_cast %14 : vector<16x8xf32> to vector<2x8x8xf32>
    %16 = vector.extract_strided_slice %11 {offsets = [0, 16], sizes = [16, 8], strides = [1, 1]} : vector<16x96xf32> to vector<16x8xf32>
    %17 = vector.shape_cast %16 : vector<16x8xf32> to vector<2x8x8xf32>
    %18 = vector.extract_strided_slice %11 {offsets = [0, 24], sizes = [16, 8], strides = [1, 1]} : vector<16x96xf32> to vector<16x8xf32>
    %19 = vector.shape_cast %18 : vector<16x8xf32> to vector<2x8x8xf32>
    %20 = tpu.concatenate %13, %15, %17, %19 in 0 : vector<2x8x8xf32>, vector<2x8x8xf32>, vector<2x8x8xf32>, vector<2x8x8xf32> -> vector<8x8x8xf32>
    %21 = arith.truncf %20 : vector<8x8x8xf32> to vector<8x8x8xbf16>
    %22 = vector.extract_strided_slice %11 {offsets = [0, 32], sizes = [16, 8], strides = [1, 1]} : vector<16x96xf32> to vector<16x8xf32>
    %23 = vector.shape_cast %22 : vector<16x8xf32> to vector<2x8x8xf32>
    %24 = vector.extract_strided_slice %11 {offsets = [0, 40], sizes = [16, 8], strides = [1, 1]} : vector<16x96xf32> to vector<16x8xf32>
    %25 = vector.shape_cast %24 : vector<16x8xf32> to vector<2x8x8xf32>
    %26 = vector.extract_strided_slice %11 {offsets = [0, 48], sizes = [16, 8], strides = [1, 1]} : vector<16x96xf32> to vector<16x8xf32>
    %27 = vector.shape_cast %26 : vector<16x8xf32> to vector<2x8x8xf32>
    %28 = vector.extract_strided_slice %11 {offsets = [0, 56], sizes = [16, 8], strides = [1, 1]} : vector<16x96xf32> to vector<16x8xf32>
    %29 = vector.shape_cast %28 : vector<16x8xf32> to vector<2x8x8xf32>
    %30 = tpu.concatenate %23, %25, %27, %29 in 0 : vector<2x8x8xf32>, vector<2x8x8xf32>, vector<2x8x8xf32>, vector<2x8x8xf32> -> vector<8x8x8xf32>
    %31 = arith.truncf %30 : vector<8x8x8xf32> to vector<8x8x8xbf16>
    %32 = vector.extract_strided_slice %11 {offsets = [0, 64], sizes = [16, 8], strides = [1, 1]} : vector<16x96xf32> to vector<16x8xf32>
    %33 = vector.shape_cast %32 : vector<16x8xf32> to vector<2x8x8xf32>
    %34 = vector.extract_strided_slice %11 {offsets = [0, 72], sizes = [16, 8], strides = [1, 1]} : vector<16x96xf32> to vector<16x8xf32>
    %35 = vector.shape_cast %34 : vector<16x8xf32> to vector<2x8x8xf32>
    %36 = vector.extract_strided_slice %11 {offsets = [0, 80], sizes = [16, 8], strides = [1, 1]} : vector<16x96xf32> to vector<16x8xf32>
    %37 = vector.shape_cast %36 : vector<16x8xf32> to vector<2x8x8xf32>
    %38 = vector.extract_strided_slice %11 {offsets = [0, 88], sizes = [16, 8], strides = [1, 1]} : vector<16x96xf32> to vector<16x8xf32>
    %39 = vector.shape_cast %38 : vector<16x8xf32> to vector<2x8x8xf32>
    %40 = tpu.concatenate %33, %35, %37, %39 in 0 : vector<2x8x8xf32>, vector<2x8x8xf32>, vector<2x8x8xf32>, vector<2x8x8xf32> -> vector<8x8x8xf32>
    %41 = arith.truncf %40 : vector<8x8x8xf32> to vector<8x8x8xbf16>
    "tpu.trace_start"() <{level = 10 : i32, message = "nqd,nkd->nqk"}> : () -> ()
    %cst_8 = arith.constant dense<0.000000e+00> : vector<8x8x8xf32>
    %42 = tpu.matmul %21, %31, %cst_8 {dimension_numbers = #tpu.dot_dimension_numbers<[2], [2], [1], [1], [0, 0, 0, 1, 1, 1], [0], [0]>} : vector<8x8x8xbf16>, vector<8x8x8xbf16>, vector<8x8x8xf32> -> vector<8x8x8xf32>
    "tpu.trace_stop"() : () -> ()
    %cst_9 = arith.constant 0.353553385 : f32
    %43 = vector.broadcast %cst_9 : f32 to vector<8x8x8xf32>
    %44 = arith.mulf %42, %43 : vector<8x8x8xf32>
    %cst_10 = arith.constant dense<0xFF800000> : vector<8x8xf32>
    %45 = vector.multi_reduction <maximumf>, %44, %cst_10 [2] : vector<8x8x8xf32> to vector<8x8xf32>
    %46 = vector.shape_cast %45 : vector<8x8xf32> to vector<8x8x1xf32>
    %47 = vector.broadcast %46 : vector<8x8x1xf32> to vector<8x8x8xf32>
    %48 = arith.subf %44, %47 : vector<8x8x8xf32>
    %49 = math.exp %48 : vector<8x8x8xf32>
    %cst_11 = arith.constant dense<0.000000e+00> : vector<8x8xf32>
    %50 = vector.multi_reduction <add>, %49, %cst_11 [2] : vector<8x8x8xf32> to vector<8x8xf32>
    %51 = vector.shape_cast %50 : vector<8x8xf32> to vector<8x8x1xf32>
    %52 = vector.broadcast %51 : vector<8x8x1xf32> to vector<8x8x8xf32>
    %53 = arith.divf %49, %52 : vector<8x8x8xf32>
    %54 = arith.truncf %53 : vector<8x8x8xf32> to vector<8x8x8xbf16>
    "tpu.trace_start"() <{level = 10 : i32, message = "nqk,nkd->nqd"}> : () -> ()
    %cst_12 = arith.constant dense<0.000000e+00> : vector<8x8x8xf32>
    %55 = tpu.matmul %54, %41, %cst_12 {dimension_numbers = #tpu.dot_dimension_numbers<[2], [1], [1], [2], [0, 0, 0, 1, 1, 2], [0], [0]>} : vector<8x8x8xbf16>, vector<8x8x8xbf16>, vector<8x8x8xf32> -> vector<8x8x8xf32>
    "tpu.trace_stop"() : () -> ()
    %c0_13 = arith.constant 0 : index
    %c0_14 = arith.constant 0 : index
    %c0_15 = arith.constant 0 : index
    %56 = vector.load %arg6[%c0_13, %c0_14, %c0_15] : memref<1x32x32xbf16, #tpu.memory_space<vmem>>, vector<1x32x32xbf16>
    %57 = vector.shape_cast %56 : vector<1x32x32xbf16> to vector<32x32xbf16>
    %c0_16 = arith.constant 0 : index
    %c0_17 = arith.constant 0 : index
    %c0_18 = arith.constant 0 : index
    %58 = vector.load %arg7[%c0_16, %c0_17, %c0_18] : memref<1x1x32xf32, #tpu.memory_space<vmem>>, vector<1x1x32xf32>
    %59 = vector.shape_cast %58 : vector<1x1x32xf32> to vector<1x32xf32>
    %60 = vector.extract_strided_slice %55 {offsets = [0, 0, 0], sizes = [2, 8, 8], strides = [1, 1, 1]} : vector<8x8x8xf32> to vector<2x8x8xf32>
    %61 = vector.shape_cast %60 : vector<2x8x8xf32> to vector<16x8xf32>
    %62 = arith.truncf %61 : vector<16x8xf32> to vector<16x8xbf16>
    %63 = vector.extract_strided_slice %57 {offsets = [0, 0], sizes = [8, 32], strides = [1, 1]} : vector<32x32xbf16> to vector<8x32xbf16>
    %cst_19 = arith.constant dense<0.000000e+00> : vector<16x32xf32>
    %64 = tpu.matmul %62, %63, %cst_19 {dimension_numbers = #tpu.dot_dimension_numbers<[1], [0], [0], [1], [0, 0, 1, 1], [], []>} : vector<16x8xbf16>, vector<8x32xbf16>, vector<16x32xf32> -> vector<16x32xf32>
    %65 = vector.broadcast %59 : vector<1x32xf32> to vector<16x32xf32>
    %66 = arith.addf %65, %64 : vector<16x32xf32>
    %67 = vector.extract_strided_slice %55 {offsets = [2, 0, 0], sizes = [2, 8, 8], strides = [1, 1, 1]} : vector<8x8x8xf32> to vector<2x8x8xf32>
    %68 = vector.shape_cast %67 : vector<2x8x8xf32> to vector<16x8xf32>
    %69 = arith.truncf %68 : vector<16x8xf32> to vector<16x8xbf16>
    %70 = vector.extract_strided_slice %57 {offsets = [8, 0], sizes = [8, 32], strides = [1, 1]} : vector<32x32xbf16> to vector<8x32xbf16>
    %cst_20 = arith.constant dense<0.000000e+00> : vector<16x32xf32>
    %71 = tpu.matmul %69, %70, %cst_20 {dimension_numbers = #tpu.dot_dimension_numbers<[1], [0], [0], [1], [0, 0, 1, 1], [], []>} : vector<16x8xbf16>, vector<8x32xbf16>, vector<16x32xf32> -> vector<16x32xf32>
    %72 = arith.addf %66, %71 : vector<16x32xf32>
    %73 = vector.extract_strided_slice %55 {offsets = [4, 0, 0], sizes = [2, 8, 8], strides = [1, 1, 1]} : vector<8x8x8xf32> to vector<2x8x8xf32>
    %74 = vector.shape_cast %73 : vector<2x8x8xf32> to vector<16x8xf32>
    %75 = arith.truncf %74 : vector<16x8xf32> to vector<16x8xbf16>
    %76 = vector.extract_strided_slice %57 {offsets = [16, 0], sizes = [8, 32], strides = [1, 1]} : vector<32x32xbf16> to vector<8x32xbf16>
    %cst_21 = arith.constant dense<0.000000e+00> : vector<16x32xf32>
    %77 = tpu.matmul %75, %76, %cst_21 {dimension_numbers = #tpu.dot_dimension_numbers<[1], [0], [0], [1], [0, 0, 1, 1], [], []>} : vector<16x8xbf16>, vector<8x32xbf16>, vector<16x32xf32> -> vector<16x32xf32>
    %78 = arith.addf %72, %77 : vector<16x32xf32>
    %79 = vector.extract_strided_slice %55 {offsets = [6, 0, 0], sizes = [2, 8, 8], strides = [1, 1, 1]} : vector<8x8x8xf32> to vector<2x8x8xf32>
    %80 = vector.shape_cast %79 : vector<2x8x8xf32> to vector<16x8xf32>
    %81 = arith.truncf %80 : vector<16x8xf32> to vector<16x8xbf16>
    %82 = vector.extract_strided_slice %57 {offsets = [24, 0], sizes = [8, 32], strides = [1, 1]} : vector<32x32xbf16> to vector<8x32xbf16>
    %cst_22 = arith.constant dense<0.000000e+00> : vector<16x32xf32>
    %83 = tpu.matmul %81, %82, %cst_22 {dimension_numbers = #tpu.dot_dimension_numbers<[1], [0], [0], [1], [0, 0, 1, 1], [], []>} : vector<16x8xbf16>, vector<8x32xbf16>, vector<16x32xf32> -> vector<16x32xf32>
    %84 = arith.addf %78, %83 : vector<16x32xf32>
    %85 = arith.addf %3, %84 : vector<16x32xf32>
    %c0_23 = arith.constant 0 : index
    %c0_24 = arith.constant 0 : index
    %c0_25 = arith.constant 0 : index
    %86 = vector.load %arg12[%c0_23, %c0_24, %c0_25] : memref<1x1x32xf32, #tpu.memory_space<vmem>>, vector<1x1x32xf32>
    %87 = vector.shape_cast %86 : vector<1x1x32xf32> to vector<1x32xf32>
    %c0_26 = arith.constant 0 : index
    %c0_27 = arith.constant 0 : index
    %c0_28 = arith.constant 0 : index
    %88 = vector.load %arg13[%c0_26, %c0_27, %c0_28] : memref<1x1x32xf32, #tpu.memory_space<vmem>>, vector<1x1x32xf32>
    %89 = vector.shape_cast %88 : vector<1x1x32xf32> to vector<1x32xf32>
    %cst_29 = arith.constant dense<0.000000e+00> : vector<16xf32>
    %90 = vector.multi_reduction <add>, %85, %cst_29 [1] : vector<16x32xf32> to vector<16xf32>
    %91 = vector.shape_cast %90 : vector<16xf32> to vector<16x1xf32>
    %cst_30 = arith.constant 3.200000e+01 : f32
    %92 = vector.broadcast %cst_30 : f32 to vector<16x1xf32>
    %93 = arith.divf %91, %92 : vector<16x1xf32>
    %94 = vector.broadcast %93 : vector<16x1xf32> to vector<16x32xf32>
    %95 = arith.subf %85, %94 : vector<16x32xf32>
    %96 = arith.mulf %95, %95 : vector<16x32xf32>
    %cst_31 = arith.constant dense<0.000000e+00> : vector<16xf32>
    %97 = vector.multi_reduction <add>, %96, %cst_31 [1] : vector<16x32xf32> to vector<16xf32>
    %98 = vector.shape_cast %97 : vector<16xf32> to vector<16x1xf32>
    %cst_32 = arith.constant 3.200000e+01 : f32
    %99 = vector.broadcast %cst_32 : f32 to vector<16x1xf32>
    %100 = arith.divf %98, %99 : vector<16x1xf32>
    %101 = vector.broadcast %93 : vector<16x1xf32> to vector<16x32xf32>
    %102 = arith.subf %85, %101 : vector<16x32xf32>
    %cst_33 = arith.constant 9.99999974E-6 : f32
    %103 = vector.broadcast %cst_33 : f32 to vector<16x1xf32>
    %104 = arith.addf %100, %103 : vector<16x1xf32>
    %105 = math.rsqrt %104 : vector<16x1xf32>
    %106 = vector.broadcast %105 : vector<16x1xf32> to vector<16x32xf32>
    %107 = arith.mulf %102, %106 : vector<16x32xf32>
    %108 = vector.broadcast %87 : vector<1x32xf32> to vector<16x32xf32>
    %109 = arith.mulf %107, %108 : vector<16x32xf32>
    %110 = vector.broadcast %89 : vector<1x32xf32> to vector<16x32xf32>
    %111 = arith.addf %109, %110 : vector<16x32xf32>
    %112 = arith.truncf %111 : vector<16x32xf32> to vector<16x32xbf16>
    %c0_34 = arith.constant 0 : index
    %c0_35 = arith.constant 0 : index
    %c0_36 = arith.constant 0 : index
    %113 = vector.load %arg8[%c0_34, %c0_35, %c0_36] : memref<1x32x64xbf16, #tpu.memory_space<vmem>>, vector<1x32x64xbf16>
    %114 = vector.shape_cast %113 : vector<1x32x64xbf16> to vector<32x64xbf16>
    %cst_37 = arith.constant dense<0.000000e+00> : vector<16x64xf32>
    %115 = tpu.matmul %112, %114, %cst_37 {dimension_numbers = #tpu.dot_dimension_numbers<[1], [0], [0], [1], [0, 0, 1, 1], [], []>} : vector<16x32xbf16>, vector<32x64xbf16>, vector<16x64xf32> -> vector<16x64xf32>
    %c0_38 = arith.constant 0 : index
    %c0_39 = arith.constant 0 : index
    %c0_40 = arith.constant 0 : index
    %116 = vector.load %arg9[%c0_38, %c0_39, %c0_40] : memref<1x1x64xf32, #tpu.memory_space<vmem>>, vector<1x1x64xf32>
    %117 = vector.shape_cast %116 : vector<1x1x64xf32> to vector<1x64xf32>
    %118 = vector.broadcast %117 : vector<1x64xf32> to vector<16x64xf32>
    %119 = arith.addf %115, %118 : vector<16x64xf32>
    %cst_41 = arith.constant 0.000000e+00 : f32
    %120 = vector.broadcast %cst_41 : f32 to vector<16x64xf32>
    %121 = arith.maximumf %119, %120 : vector<16x64xf32>
    %122 = arith.truncf %121 : vector<16x64xf32> to vector<16x64xbf16>
    %c0_42 = arith.constant 0 : index
    %c0_43 = arith.constant 0 : index
    %c0_44 = arith.constant 0 : index
    %123 = vector.load %arg10[%c0_42, %c0_43, %c0_44] : memref<1x64x32xbf16, #tpu.memory_space<vmem>>, vector<1x64x32xbf16>
    %124 = vector.shape_cast %123 : vector<1x64x32xbf16> to vector<64x32xbf16>
    %cst_45 = arith.constant dense<0.000000e+00> : vector<16x32xf32>
    %125 = tpu.matmul %122, %124, %cst_45 {dimension_numbers = #tpu.dot_dimension_numbers<[1], [0], [0], [1], [0, 0, 1, 1], [], []>} : vector<16x64xbf16>, vector<64x32xbf16>, vector<16x32xf32> -> vector<16x32xf32>
    %c0_46 = arith.constant 0 : index
    %c0_47 = arith.constant 0 : index
    %c0_48 = arith.constant 0 : index
    %126 = vector.load %arg11[%c0_46, %c0_47, %c0_48] : memref<1x1x32xf32, #tpu.memory_space<vmem>>, vector<1x1x32xf32>
    %127 = vector.shape_cast %126 : vector<1x1x32xf32> to vector<1x32xf32>
    %128 = vector.broadcast %127 : vector<1x32xf32> to vector<16x32xf32>
    %129 = arith.addf %125, %128 : vector<16x32xf32>
    %130 = arith.addf %111, %129 : vector<16x32xf32>
    %c0_49 = arith.constant 0 : index
    %c0_50 = arith.constant 0 : index
    %c0_51 = arith.constant 0 : index
    %131 = vector.load %arg14[%c0_49, %c0_50, %c0_51] : memref<1x1x32xf32, #tpu.memory_space<vmem>>, vector<1x1x32xf32>
    %132 = vector.shape_cast %131 : vector<1x1x32xf32> to vector<1x32xf32>
    %c0_52 = arith.constant 0 : index
    %c0_53 = arith.constant 0 : index
    %c0_54 = arith.constant 0 : index
    %133 = vector.load %arg15[%c0_52, %c0_53, %c0_54] : memref<1x1x32xf32, #tpu.memory_space<vmem>>, vector<1x1x32xf32>
    %134 = vector.shape_cast %133 : vector<1x1x32xf32> to vector<1x32xf32>
    %cst_55 = arith.constant dense<0.000000e+00> : vector<16xf32>
    %135 = vector.multi_reduction <add>, %130, %cst_55 [1] : vector<16x32xf32> to vector<16xf32>
    %136 = vector.shape_cast %135 : vector<16xf32> to vector<16x1xf32>
    %cst_56 = arith.constant 3.200000e+01 : f32
    %137 = vector.broadcast %cst_56 : f32 to vector<16x1xf32>
    %138 = arith.divf %136, %137 : vector<16x1xf32>
    %139 = vector.broadcast %138 : vector<16x1xf32> to vector<16x32xf32>
    %140 = arith.subf %130, %139 : vector<16x32xf32>
    %141 = arith.mulf %140, %140 : vector<16x32xf32>
    %cst_57 = arith.constant dense<0.000000e+00> : vector<16xf32>
    %142 = vector.multi_reduction <add>, %141, %cst_57 [1] : vector<16x32xf32> to vector<16xf32>
    %143 = vector.shape_cast %142 : vector<16xf32> to vector<16x1xf32>
    %cst_58 = arith.constant 3.200000e+01 : f32
    %144 = vector.broadcast %cst_58 : f32 to vector<16x1xf32>
    %145 = arith.divf %143, %144 : vector<16x1xf32>
    %146 = vector.broadcast %138 : vector<16x1xf32> to vector<16x32xf32>
    %147 = arith.subf %130, %146 : vector<16x32xf32>
    %cst_59 = arith.constant 9.99999974E-6 : f32
    %148 = vector.broadcast %cst_59 : f32 to vector<16x1xf32>
    %149 = arith.addf %145, %148 : vector<16x1xf32>
    %150 = math.rsqrt %149 : vector<16x1xf32>
    %151 = vector.broadcast %150 : vector<16x1xf32> to vector<16x32xf32>
    %152 = arith.mulf %147, %151 : vector<16x32xf32>
    %153 = vector.broadcast %132 : vector<1x32xf32> to vector<16x32xf32>
    %154 = arith.mulf %152, %153 : vector<16x32xf32>
    %155 = vector.broadcast %134 : vector<1x32xf32> to vector<16x32xf32>
    %156 = arith.addf %154, %155 : vector<16x32xf32>
    %c0_60 = arith.constant 0 : index
    %c0_61 = arith.constant 0 : index
    %157 = vector.load %arg17[%c0_60, %c0_61] : memref<16x32xf32, #tpu.memory_space<vmem>>, vector<16x32xf32>
    tpu.vector_store %arg17[%c0_60, %c0_61], %156 {strides = array<i32>} : memref<16x32xf32, #tpu.memory_space<vmem>>, vector<16x32xf32>,
    %c1_i32 = arith.constant 1 : i32
    %158 = arith.cmpi eq, %arg0, %c1_i32 : i32
    %159 = arith.extui %158 : i1 to i32
    %c0_i32_62 = arith.constant 0 : i32
    %160 = arith.cmpi ne, %159, %c0_i32_62 : i32
    scf.if %160 {
      %c0_63 = arith.constant 0 : index
      %c0_64 = arith.constant 0 : index
      %161 = vector.load %arg16[%c0_63, %c0_64] : memref<16x32xf32, #tpu.memory_space<vmem>>, vector<16x32xf32>
      tpu.vector_store %arg16[%c0_63, %c0_64], %156 {strides = array<i32>} : memref<16x32xf32, #tpu.memory_space<vmem>>, vector<16x32xf32>,
    } else {
    }
    return
  }
  func.func @transform_1(%arg0: i32) -> (i32, i32) {
    %c0_i32 = arith.constant 0 : i32
    %c0_i32_0 = arith.constant 0 : i32
    %c0_i32_1 = arith.constant 0 : i32
    return %c0_i32, %c0_i32_0 : i32, i32
  }
  func.func @transform_2(%arg0: i32) -> (i32, i32) {
    %c0_i32 = arith.constant 0 : i32
    %c0_i32_0 = arith.constant 0 : i32
    %c0_i32_1 = arith.constant 0 : i32
    return %c0_i32, %c0_i32_0 : i32, i32
  }
  func.func @transform_3(%arg0: i32) -> (i32, i32, i32) {
    %c0_i32 = arith.constant 0 : i32
    %c0_i32_0 = arith.constant 0 : i32
    %c0_i32_1 = arith.constant 0 : i32
    return %arg0, %c0_i32, %c0_i32_0 : i32, i32, i32
  }
  func.func @transform_4(%arg0: i32) -> (i32, i32, i32) {
    %c0_i32 = arith.constant 0 : i32
    %c0_i32_0 = arith.constant 0 : i32
    %c0_i32_1 = arith.constant 0 : i32
    return %arg0, %c0_i32, %c0_i32_0 : i32, i32, i32
  }
  func.func @transform_5(%arg0: i32) -> (i32, i32, i32) {
    %c0_i32 = arith.constant 0 : i32
    %c0_i32_0 = arith.constant 0 : i32
    %c0_i32_1 = arith.constant 0 : i32
    return %arg0, %c0_i32, %c0_i32_0 : i32, i32, i32
  }
  func.func @transform_6(%arg0: i32) -> (i32, i32, i32) {
    %c0_i32 = arith.constant 0 : i32
    %c0_i32_0 = arith.constant 0 : i32
    %c0_i32_1 = arith.constant 0 : i32
    return %arg0, %c0_i32, %c0_i32_0 : i32, i32, i32
  }
  func.func @transform_7(%arg0: i32) -> (i32, i32, i32) {
    %c0_i32 = arith.constant 0 : i32
    %c0_i32_0 = arith.constant 0 : i32
    %c0_i32_1 = arith.constant 0 : i32
    return %arg0, %c0_i32, %c0_i32_0 : i32, i32, i32
  }
  func.func @transform_8(%arg0: i32) -> (i32, i32, i32) {
    %c0_i32 = arith.constant 0 : i32
    %c0_i32_0 = arith.constant 0 : i32
    %c0_i32_1 = arith.constant 0 : i32
    return %arg0, %c0_i32, %c0_i32_0 : i32, i32, i32
  }
  func.func @transform_9(%arg0: i32) -> (i32, i32, i32) {
    %c0_i32 = arith.constant 0 : i32
    %c0_i32_0 = arith.constant 0 : i32
    %c0_i32_1 = arith.constant 0 : i32
    return %arg0, %c0_i32, %c0_i32_0 : i32, i32, i32
  }
  func.func @transform_10(%arg0: i32) -> (i32, i32, i32) {
    %c0_i32 = arith.constant 0 : i32
    %c0_i32_0 = arith.constant 0 : i32
    %c0_i32_1 = arith.constant 0 : i32
    return %arg0, %c0_i32, %c0_i32_0 : i32, i32, i32
  }
  func.func @transform_11(%arg0: i32) -> (i32, i32, i32) {
    %c0_i32 = arith.constant 0 : i32
    %c0_i32_0 = arith.constant 0 : i32
    %c0_i32_1 = arith.constant 0 : i32
    return %arg0, %c0_i32, %c0_i32_0 : i32, i32, i32
  }
  func.func @transform_12(%arg0: i32) -> (i32, i32, i32) {
    %c0_i32 = arith.constant 0 : i32
    %c0_i32_0 = arith.constant 0 : i32
    %c0_i32_1 = arith.constant 0 : i32
    return %arg0, %c0_i32, %c0_i32_0 : i32, i32, i32
  }
  func.func @transform_13(%arg0: i32) -> (i32, i32, i32) {
    %c0_i32 = arith.constant 0 : i32
    %c0_i32_0 = arith.constant 0 : i32
    %c0_i32_1 = arith.constant 0 : i32
    return %arg0, %c0_i32, %c0_i32_0 : i32, i32, i32
  }
  func.func @transform_14(%arg0: i32) -> (i32, i32, i32) {
    %c0_i32 = arith.constant 0 : i32
    %c0_i32_0 = arith.constant 0 : i32
    %c0_i32_1 = arith.constant 0 : i32
    return %arg0, %c0_i32, %c0_i32_0 : i32, i32, i32
  }
  func.func @transform_15(%arg0: i32) -> (i32, i32) {
    %c0_i32 = arith.constant 0 : i32
    %c0_i32_0 = arith.constant 0 : i32
    %c0_i32_1 = arith.constant 0 : i32
    return %c0_i32, %c0_i32_0 : i32, i32
  }
}

</mosaic_0001>

<llo_original>
// kernel: tpu_custom_call.1
$region0: #{tpu_custom_call.1}
  #allocation0 [shape = 'u32[]', space=smem, size = 0x4, offset = 0x4, fixed_abs, tag = 'smem constant byte address 0x4 - core index']
  #allocation1 [shape = 'u32[72,128]{1,0:T(1,128)}', space=vmem, size = 0x9000, scoped, tag = 'internal scratch']
  #allocation2 [shape = 'f32[16,32]{1,0:T(8,128)}', space=vmem, size = 0x2000, scoped, tag = 'scratch operand']
  #allocation3 [shape = 's32[1]{0}', space=sflag, size = 0x4, scoped, tag = 'scratch operand']
  #allocation11 [shape = 's32[]', space=sflag, size = 0x4, offset = 0, fixed_abs, tag = 'sflag constant byte address 0x0 - dummy sync flag']
  #allocation12 [shape = 's32[]', space=sflag, size = 0x4, offset = 0, fixed_abs, tag = 'sflag constant byte address 0x0 - dummy sync flag']
  #allocation13 [shape = 'u32[]', space=smem, size = 0x4, offset = 0x44, fixed_abs, tag = 'smem constant byte address 0x44 - assertion arg 0']
  #allocation14 [shape = 'u32[]', space=smem, size = 0x4, offset = 0x48, fixed_abs, tag = 'smem constant byte address 0x48 - assertion arg 1']
  %s0 = inlined_call_operand.hbm [shape: f32[16,32], index: 0, kind: input, shape index: {}]
  %s1 = inlined_call_operand.hbm [shape: f32[1,32], index: 1, kind: input, shape index: {}]
  %s2 = inlined_call_operand.vmem [shape: f32[1,32], index: 2, kind: input, shape index: {}]
  %s3 = inlined_call_operand.vmem [shape: bf16[2,32,96], index: 3, kind: input, shape index: {}]
  %s4 = inlined_call_operand.vmem [shape: f32[2,1,96], index: 4, kind: input, shape index: {}]
  %s5 = inlined_call_operand.vmem [shape: bf16[2,32,32], index: 5, kind: input, shape index: {}]
  %s6 = inlined_call_operand.vmem [shape: f32[2,1,32], index: 6, kind: input, shape index: {}]
  %s7 = inlined_call_operand.vmem [shape: bf16[2,32,64], index: 7, kind: input, shape index: {}]
  %s8 = inlined_call_operand.vmem [shape: f32[2,1,64], index: 8, kind: input, shape index: {}]
  %s9 = inlined_call_operand.vmem [shape: bf16[2,64,32], index: 9, kind: input, shape index: {}]
  %s10 = inlined_call_operand.vmem [shape: f32[2,1,32], index: 10, kind: input, shape index: {}]
  %s11 = inlined_call_operand.hbm [shape: f32[2,1,32], index: 11, kind: input, shape index: {}]
  %s12 = inlined_call_operand.vmem [shape: f32[2,1,32], index: 12, kind: input, shape index: {}]
  %s13 = inlined_call_operand.hbm [shape: f32[2,1,32], index: 13, kind: input, shape index: {}]
  %s14 = inlined_call_operand.vmem [shape: f32[2,1,32], index: 14, kind: input, shape index: {}]
  %s15 = inlined_call_operand.hbm [shape: f32[16,32], index: 15, kind: output, shape index: {}]
  %s16 = sld [smem:[#allocation0]]
  $region113: #{tpu_custom_call.1} parent=0
    _
  %s18 = ssub.s32 1, %s16
  %s19 = scalar_select 0, %s18, %s16
  $region1: #{tpu_custom_call.1} parent=0
    #allocation4 [shape = 'u8[512]{0}', space=vmem, size = 0x400, scoped, tag = 'input window, operand 1, single buffered']
    #allocation5 [shape = 's32[2]{0}', space=sflag, size = 0x8, scoped, tag = 'scoped memory for tpu_custom_call.1']
    #allocation6 [shape = 's32[2]{0}', space=sflag, size = 0x8, scoped, tag = 'scoped memory for tpu_custom_call.1']
    #allocation7 [shape = 'u8[1024]{0}', space=vmem, size = 0x400, scoped, tag = 'input window, operand 11']
    #allocation8 [shape = 's32[2]{0}', space=sflag, size = 0x8, scoped, tag = 'scoped memory for tpu_custom_call.1']
    #allocation9 [shape = 'u8[1024]{0}', space=vmem, size = 0x400, scoped, tag = 'input window, operand 13']
    #allocation10 [shape = 'u8[8192]{0}', space=vmem, size = 0x2000, scoped, tag = 'output window, operand 0, single buffered']
    %20 = vsyncpa [#allocation5], 0
    %21 = vsyncpa [#allocation8], 0
    %s22 = scalar_lea.sflag [#allocation8], 1
    %23 = vsyncpa %s22, 0
    %24 = vsyncpa [#allocation6], 0
    loop: start=0, step=1, limit=4
    $region2: #{tpu_custom_call.1} parent=1 // loop_pre_header
      _
    $region3: #{tpu_custom_call.1} parent=1 // loop_header
      %s26 = sphi 0, %s30
      %p27 = scmp.ge.s32.totalorder %s26, 4
      %s34 = sphi 0, %s34
      %s36 = sphi 0, %s34
      %s37 = sphi 0, %s36
      %s51 = sphi 0, %s37
      %s55 = sphi 0, %s55
      %s57 = sphi 0, %s55
      %s58 = sphi 0, %s57
      %s72 = sphi 0, %s58
      %s78 = sphi 0, %s80
      %s81 = sphi 0, %s78
      %s82 = sphi 0, %s81
      %s98 = sphi 0, %s82
      %s104 = sphi 0, %s106
      %s107 = sphi 0, %s104
      %s108 = sphi 0, %s107
      %s124 = sphi 0, %s108
      %s130 = sphi 0, %s132
      %s133 = sphi 0, %s130
      %s134 = sphi 0, %s133
      %s150 = sphi 0, %s134
      %s156 = sphi 0, %s158
      %s159 = sphi 0, %s156
      %s160 = sphi 0, %s159
      %s176 = sphi 0, %s160
      %s182 = sphi 0, %s184
      %s185 = sphi 0, %s182
      %s186 = sphi 0, %s185
      %s202 = sphi 0, %s186
      %s208 = sphi 0, %s210
      %s211 = sphi 0, %s208
      %s212 = sphi 0, %s211
      %s228 = sphi 0, %s212
      %s234 = sphi 0, %s236
      %s237 = sphi 0, %s234
      %s238 = sphi 0, %s237
      %s254 = sphi 0, %s238
      %s260 = sphi 0, %s262
      %s263 = sphi 0, %s260
      %s264 = sphi 0, %s263
      %s280 = sphi 0, %s264
      %s286 = sphi 0, %s288
      %s289 = sphi 0, %s286
      %s290 = sphi 0, %s289
      %s306 = sphi 0, %s290
      %s312 = sphi 0, %s314
      %s315 = sphi 0, %s312
      %s316 = sphi 0, %s315
      %s332 = sphi 0, %s316
      %s338 = sphi 0, %s340
      %s341 = sphi 0, %s338
      %s342 = sphi 0, %s341
      %s358 = sphi 0, %s342
      %s364 = sphi 0, %s366
      %s367 = sphi 0, %s364
      %s368 = sphi 0, %s367
      %s384 = sphi 0, %s368
      %s388 = sphi 0, %s388
      %s390 = sphi 0, %s388
      %s391 = sphi 0, %s390
      %s405 = sphi 0, %s391
    $region4: #{tpu_custom_call.1} parent=1 // loop_header_branch
      %29 = sbr.rel (%p27) target = $region8
    $region5: #{tpu_custom_call.1} parent=1 // loop_body
      %s31 = ssub.s32 %s26, 1
      %s32 = ssub.s32 %s26, 2
      %s33 = sadd.s32 %s26, 1
      %s35 = sadd.s32 %s34, 1
      %p38 = scmp.eq.s32.totalorder %s26, 1
      %p39 = scmp.ne.s32.totalorder %s34, %s36
      %p40 = scmp.eq.s32.totalorder %s26, 0
      %p41 = por %p39, %p40
      %p42 = scmp.ne.s32.totalorder %s34, %s36
      %p43 = scmp.eq.s32.totalorder %s31, 1
      %p44 = por %p42, %p43
      %p45 = scmp.ne.s32.totalorder %s36, %s37
      %p46 = scmp.eq.s32.totalorder %s31, 0
      %p47 = por %p45, %p46
      %p48 = scmp.ne.s32.totalorder %s36, %s37
      %p49 = scmp.eq.s32.totalorder %s32, 1
      %p50 = por %p48, %p49
      %p52 = scmp.ne.s32.totalorder %s37, %s51
      %p53 = scmp.eq.s32.totalorder %s32, 0
      %p54 = por %p52, %p53
      %s56 = sadd.s32 %s55, 1
      %p59 = scmp.eq.s32.totalorder %s26, 1
      %p60 = scmp.ne.s32.totalorder %s55, %s57
      %p61 = scmp.eq.s32.totalorder %s26, 0
      %p62 = por %p60, %p61
      %p63 = scmp.ne.s32.totalorder %s55, %s57
      %p64 = scmp.eq.s32.totalorder %s31, 1
      %p65 = por %p63, %p64
      %p66 = scmp.ne.s32.totalorder %s57, %s58
      %p67 = scmp.eq.s32.totalorder %s31, 0
      %p68 = por %p66, %p67
      %p69 = scmp.ne.s32.totalorder %s57, %s58
      %p70 = scmp.eq.s32.totalorder %s32, 1
      %p71 = por %p69, %p70
      %p73 = scmp.ne.s32.totalorder %s58, %s72
      %p74 = scmp.eq.s32.totalorder %s32, 0
      %p75 = por %p73, %p74
      %s76 = ssub.s32 %s26, %s33
      %p77 = scmp.eq.s32.totalorder %s76, 0
      %s79 = sadd.s32 %s78, 1
      %s80 = scalar_select %p77, %s78, %s79
      %p83 = pneg %p77
      %p84 = scmp.eq.s32.totalorder %s26, 1
      %p85 = por %p83, %p84
      %p86 = scmp.ne.s32.totalorder %s78, %s81
      %p87 = scmp.eq.s32.totalorder %s26, 0
      %p88 = por %p86, %p87
      %p89 = scmp.ne.s32.totalorder %s78, %s81
      %p90 = scmp.eq.s32.totalorder %s31, 1
      %p91 = por %p89, %p90
      %p92 = scmp.ne.s32.totalorder %s81, %s82
      %p93 = scmp.eq.s32.totalorder %s31, 0
      %p94 = por %p92, %p93
      %p95 = scmp.ne.s32.totalorder %s81, %s82
      %p96 = scmp.eq.s32.totalorder %s32, 1
      %p97 = por %p95, %p96
      %p99 = scmp.ne.s32.totalorder %s82, %s98
      %p100 = scmp.eq.s32.totalorder %s32, 0
      %p101 = por %p99, %p100
      %s102 = ssub.s32 %s26, %s33
      %p103 = scmp.eq.s32.totalorder %s102, 0
      %s105 = sadd.s32 %s104, 1
      %s106 = scalar_select %p103, %s104, %s105
      %p109 = pneg %p103
      %p110 = scmp.eq.s32.totalorder %s26, 1
      %p111 = por %p109, %p110
      %p112 = scmp.ne.s32.totalorder %s104, %s107
      %p113 = scmp.eq.s32.totalorder %s26, 0
      %p114 = por %p112, %p113
      %p115 = scmp.ne.s32.totalorder %s104, %s107
      %p116 = scmp.eq.s32.totalorder %s31, 1
      %p117 = por %p115, %p116
      %p118 = scmp.ne.s32.totalorder %s107, %s108
      %p119 = scmp.eq.s32.totalorder %s31, 0
      %p120 = por %p118, %p119
      %p121 = scmp.ne.s32.totalorder %s107, %s108
      %p122 = scmp.eq.s32.totalorder %s32, 1
      %p123 = por %p121, %p122
      %p125 = scmp.ne.s32.totalorder %s108, %s124
      %p126 = scmp.eq.s32.totalorder %s32, 0
      %p127 = por %p125, %p126
      %s128 = ssub.s32 %s26, %s33
      %p129 = scmp.eq.s32.totalorder %s128, 0
      %s131 = sadd.s32 %s130, 1
      %s132 = scalar_select %p129, %s130, %s131
      %p135 = pneg %p129
      %p136 = scmp.eq.s32.totalorder %s26, 1
      %p137 = por %p135, %p136
      %p138 = scmp.ne.s32.totalorder %s130, %s133
      %p139 = scmp.eq.s32.totalorder %s26, 0
      %p140 = por %p138, %p139
      %p141 = scmp.ne.s32.totalorder %s130, %s133
      %p142 = scmp.eq.s32.totalorder %s31, 1
      %p143 = por %p141, %p142
      %p144 = scmp.ne.s32.totalorder %s133, %s134
      %p145 = scmp.eq.s32.totalorder %s31, 0
      %p146 = por %p144, %p145
      %p147 = scmp.ne.s32.totalorder %s133, %s134
      %p148 = scmp.eq.s32.totalorder %s32, 1
      %p149 = por %p147, %p148
      %p151 = scmp.ne.s32.totalorder %s134, %s150
      %p152 = scmp.eq.s32.totalorder %s32, 0
      %p153 = por %p151, %p152
      %s154 = ssub.s32 %s26, %s33
      %p155 = scmp.eq.s32.totalorder %s154, 0
      %s157 = sadd.s32 %s156, 1
      %s158 = scalar_select %p155, %s156, %s157
      %p161 = pneg %p155
      %p162 = scmp.eq.s32.totalorder %s26, 1
      %p163 = por %p161, %p162
      %p164 = scmp.ne.s32.totalorder %s156, %s159
      %p165 = scmp.eq.s32.totalorder %s26, 0
      %p166 = por %p164, %p165
      %p167 = scmp.ne.s32.totalorder %s156, %s159
      %p168 = scmp.eq.s32.totalorder %s31, 1
      %p169 = por %p167, %p168
      %p170 = scmp.ne.s32.totalorder %s159, %s160
      %p171 = scmp.eq.s32.totalorder %s31, 0
      %p172 = por %p170, %p171
      %p173 = scmp.ne.s32.totalorder %s159, %s160
      %p174 = scmp.eq.s32.totalorder %s32, 1
      %p175 = por %p173, %p174
      %p177 = scmp.ne.s32.totalorder %s160, %s176
      %p178 = scmp.eq.s32.totalorder %s32, 0
      %p179 = por %p177, %p178
      %s180 = ssub.s32 %s26, %s33
      %p181 = scmp.eq.s32.totalorder %s180, 0
      %s183 = sadd.s32 %s182, 1
      %s184 = scalar_select %p181, %s182, %s183
      %p187 = pneg %p181
      %p188 = scmp.eq.s32.totalorder %s26, 1
      %p189 = por %p187, %p188
      %p190 = scmp.ne.s32.totalorder %s182, %s185
      %p191 = scmp.eq.s32.totalorder %s26, 0
      %p192 = por %p190, %p191
      %p193 = scmp.ne.s32.totalorder %s182, %s185
      %p194 = scmp.eq.s32.totalorder %s31, 1
      %p195 = por %p193, %p194
      %p196 = scmp.ne.s32.totalorder %s185, %s186
      %p197 = scmp.eq.s32.totalorder %s31, 0
      %p198 = por %p196, %p197
      %p199 = scmp.ne.s32.totalorder %s185, %s186
      %p200 = scmp.eq.s32.totalorder %s32, 1
      %p201 = por %p199, %p200
      %p203 = scmp.ne.s32.totalorder %s186, %s202
      %p204 = scmp.eq.s32.totalorder %s32, 0
      %p205 = por %p203, %p204
      %s206 = ssub.s32 %s26, %s33
      %p207 = scmp.eq.s32.totalorder %s206, 0
      %s209 = sadd.s32 %s208, 1
      %s210 = scalar_select %p207, %s208, %s209
      %p213 = pneg %p207
      %p214 = scmp.eq.s32.totalorder %s26, 1
      %p215 = por %p213, %p214
      %p216 = scmp.ne.s32.totalorder %s208, %s211
      %p217 = scmp.eq.s32.totalorder %s26, 0
      %p218 = por %p216, %p217
      %p219 = scmp.ne.s32.totalorder %s208, %s211
      %p220 = scmp.eq.s32.totalorder %s31, 1
      %p221 = por %p219, %p220
      %p222 = scmp.ne.s32.totalorder %s211, %s212
      %p223 = scmp.eq.s32.totalorder %s31, 0
      %p224 = por %p222, %p223
      %p225 = scmp.ne.s32.totalorder %s211, %s212
      %p226 = scmp.eq.s32.totalorder %s32, 1
      %p227 = por %p225, %p226
      %p229 = scmp.ne.s32.totalorder %s212, %s228
      %p230 = scmp.eq.s32.totalorder %s32, 0
      %p231 = por %p229, %p230
      %s232 = ssub.s32 %s26, %s33
      %p233 = scmp.eq.s32.totalorder %s232, 0
      %s235 = sadd.s32 %s234, 1
      %s236 = scalar_select %p233, %s234, %s235
      %p239 = pneg %p233
      %p240 = scmp.eq.s32.totalorder %s26, 1
      %p241 = por %p239, %p240
      %p242 = scmp.ne.s32.totalorder %s234, %s237
      %p243 = scmp.eq.s32.totalorder %s26, 0
      %p244 = por %p242, %p243
      %p245 = scmp.ne.s32.totalorder %s234, %s237
      %p246 = scmp.eq.s32.totalorder %s31, 1
      %p247 = por %p245, %p246
      %p248 = scmp.ne.s32.totalorder %s237, %s238
      %p249 = scmp.eq.s32.totalorder %s31, 0
      %p250 = por %p248, %p249
      %p251 = scmp.ne.s32.totalorder %s237, %s238
      %p252 = scmp.eq.s32.totalorder %s32, 1
      %p253 = por %p251, %p252
      %p255 = scmp.ne.s32.totalorder %s238, %s254
      %p256 = scmp.eq.s32.totalorder %s32, 0
      %p257 = por %p255, %p256
      %s258 = ssub.s32 %s26, %s33
      %p259 = scmp.eq.s32.totalorder %s258, 0
      %s261 = sadd.s32 %s260, 1
      %s262 = scalar_select %p259, %s260, %s261
      %p265 = pneg %p259
      %p266 = scmp.eq.s32.totalorder %s26, 1
      %p267 = por %p265, %p266
      %p268 = scmp.ne.s32.totalorder %s260, %s263
      %p269 = scmp.eq.s32.totalorder %s26, 0
      %p270 = por %p268, %p269
      %p271 = scmp.ne.s32.totalorder %s260, %s263
      %p272 = scmp.eq.s32.totalorder %s31, 1
      %p273 = por %p271, %p272
      %p274 = scmp.ne.s32.totalorder %s263, %s264
      %p275 = scmp.eq.s32.totalorder %s31, 0
      %p276 = por %p274, %p275
      %p277 = scmp.ne.s32.totalorder %s263, %s264
      %p278 = scmp.eq.s32.totalorder %s32, 1
      %p279 = por %p277, %p278
      %p281 = scmp.ne.s32.totalorder %s264, %s280
      %p282 = scmp.eq.s32.totalorder %s32, 0
      %p283 = por %p281, %p282
      %s284 = ssub.s32 %s26, %s33
      %p285 = scmp.eq.s32.totalorder %s284, 0
      %s287 = sadd.s32 %s286, 1
      %s288 = scalar_select %p285, %s286, %s287
      %p291 = pneg %p285
      %p292 = scmp.eq.s32.totalorder %s26, 1
      %p293 = por %p291, %p292
      %p294 = scmp.ne.s32.totalorder %s286, %s289
      %p295 = scmp.eq.s32.totalorder %s26, 0
      %p296 = por %p294, %p295
      %p297 = scmp.ne.s32.totalorder %s286, %s289
      %p298 = scmp.eq.s32.totalorder %s31, 1
      %p299 = por %p297, %p298
      %p300 = scmp.ne.s32.totalorder %s289, %s290
      %p301 = scmp.eq.s32.totalorder %s31, 0
      %p302 = por %p300, %p301
      %p303 = scmp.ne.s32.totalorder %s289, %s290
      %p304 = scmp.eq.s32.totalorder %s32, 1
      %p305 = por %p303, %p304
      %p307 = scmp.ne.s32.totalorder %s290, %s306
      %p308 = scmp.eq.s32.totalorder %s32, 0
      %p309 = por %p307, %p308
      %s310 = ssub.s32 %s26, %s33
      %p311 = scmp.eq.s32.totalorder %s310, 0
      %s313 = sadd.s32 %s312, 1
      %s314 = scalar_select %p311, %s312, %s313
      %p317 = pneg %p311
      %p318 = scmp.eq.s32.totalorder %s26, 1
      %p319 = por %p317, %p318
      %p320 = scmp.ne.s32.totalorder %s312, %s315
      %p321 = scmp.eq.s32.totalorder %s26, 0
      %p322 = por %p320, %p321
      %p323 = scmp.ne.s32.totalorder %s312, %s315
      %p324 = scmp.eq.s32.totalorder %s31, 1
      %p325 = por %p323, %p324
      %p326 = scmp.ne.s32.totalorder %s315, %s316
      %p327 = scmp.eq.s32.totalorder %s31, 0
      %p328 = por %p326, %p327
      %p329 = scmp.ne.s32.totalorder %s315, %s316
      %p330 = scmp.eq.s32.totalorder %s32, 1
      %p331 = por %p329, %p330
      %p333 = scmp.ne.s32.totalorder %s316, %s332
      %p334 = scmp.eq.s32.totalorder %s32, 0
      %p335 = por %p333, %p334
      %s336 = ssub.s32 %s26, %s33
      %p337 = scmp.eq.s32.totalorder %s336, 0
      %s339 = sadd.s32 %s338, 1
      %s340 = scalar_select %p337, %s338, %s339
      %p343 = pneg %p337
      %p344 = scmp.eq.s32.totalorder %s26, 1
      %p345 = por %p343, %p344
      %p346 = scmp.ne.s32.totalorder %s338, %s341
      %p347 = scmp.eq.s32.totalorder %s26, 0
      %p348 = por %p346, %p347
      %p349 = scmp.ne.s32.totalorder %s338, %s341
      %p350 = scmp.eq.s32.totalorder %s31, 1
      %p351 = por %p349, %p350
      %p352 = scmp.ne.s32.totalorder %s341, %s342
      %p353 = scmp.eq.s32.totalorder %s31, 0
      %p354 = por %p352, %p353
      %p355 = scmp.ne.s32.totalorder %s341, %s342
      %p356 = scmp.eq.s32.totalorder %s32, 1
      %p357 = por %p355, %p356
      %p359 = scmp.ne.s32.totalorder %s342, %s358
      %p360 = scmp.eq.s32.totalorder %s32, 0
      %p361 = por %p359, %p360
      %s362 = ssub.s32 %s26, %s33
      %p363 = scmp.eq.s32.totalorder %s362, 0
      %s365 = sadd.s32 %s364, 1
      %s366 = scalar_select %p363, %s364, %s365
      %p369 = pneg %p363
      %p370 = scmp.eq.s32.totalorder %s26, 1
      %p371 = por %p369, %p370
      %p372 = scmp.ne.s32.totalorder %s364, %s367
      %p373 = scmp.eq.s32.totalorder %s26, 0
      %p374 = por %p372, %p373
      %p375 = scmp.ne.s32.totalorder %s364, %s367
      %p376 = scmp.eq.s32.totalorder %s31, 1
      %p377 = por %p375, %p376
      %p378 = scmp.ne.s32.totalorder %s367, %s368
      %p379 = scmp.eq.s32.totalorder %s31, 0
      %p380 = por %p378, %p379
      %p381 = scmp.ne.s32.totalorder %s367, %s368
      %p382 = scmp.eq.s32.totalorder %s32, 1
      %p383 = por %p381, %p382
      %p385 = scmp.ne.s32.totalorder %s368, %s384
      %p386 = scmp.eq.s32.totalorder %s32, 0
      %p387 = por %p385, %p386
      %s389 = sadd.s32 %s388, 1
      %p392 = scmp.eq.s32.totalorder %s26, 1
      %p393 = scmp.ne.s32.totalorder %s388, %s390
      %p394 = scmp.eq.s32.totalorder %s26, 0
      %p395 = por %p393, %p394
      %p396 = scmp.ne.s32.totalorder %s388, %s390
      %p397 = scmp.eq.s32.totalorder %s31, 1
      %p398 = por %p396, %p397
      %p399 = scmp.ne.s32.totalorder %s390, %s391
      %p400 = scmp.eq.s32.totalorder %s31, 0
      %p401 = por %p399, %p400
      %p402 = scmp.ne.s32.totalorder %s390, %s391
      %p403 = scmp.eq.s32.totalorder %s32, 1
      %p404 = por %p402, %p403
      %p406 = scmp.ne.s32.totalorder %s391, %s405
      %p407 = scmp.eq.s32.totalorder %s32, 0
      %p408 = por %p406, %p407
      %p409 = scmp.le.s32.totalorder 1, %s26
      %p410 = scmp.lt.s32.totalorder %s26, 3
      %p411 = pnand %p409, %p410
      %p412 = pneg %p411
      // Predicated region
      $region9: #{tpu_custom_call.1} parent=5 // pred_check
        _
      $region10: #{tpu_custom_call.1} parent=5 // pred_check_branch
        %414 = sbr.rel (%p411) target = $region12
      $region11: #{tpu_custom_call.1} parent=5 // pred_region
        %s415 = ssub.s32 %s26, 1
        // Predicated region
        $region13: #{tpu_custom_call.1} parent=11 // pred_check
          %p416 = pneg %p47
        $region14: #{tpu_custom_call.1} parent=11 // pred_check_branch
          %418 = sbr.rel (%p416) target = $region16
        $region15: #{tpu_custom_call.1} parent=11 // pred_region
          %420 = vsyncadd [#allocation5], 0
          %s422 = sshll.u32 %s1, 4
          %s423 = int_to_ptr.hbm [resolvable:$true] %s422
          %s424 = sshll.u32 [#allocation4], 4
          %s425 = int_to_ptr.vmem [resolvable:$true] %s424
          %427 = dma.hbm_to_vmem [thread:$0]  %s423, 16, %s425, [#allocation5]
        $region16: #{tpu_custom_call.1} parent=11 // pred_fallthru
          _
        // Predicated region
        $region17: #{tpu_custom_call.1} parent=11 // pred_check
          %p428 = pneg %p68
        $region18: #{tpu_custom_call.1} parent=11 // pred_check_branch
          %430 = sbr.rel (%p428) target = $region20
        $region19: #{tpu_custom_call.1} parent=11 // pred_region
          _
        $region20: #{tpu_custom_call.1} parent=11 // pred_fallthru
          _
      $region12: #{tpu_custom_call.1} parent=5 // pred_fallthru
        _
      %p431 = scmp.lt.s32.totalorder %s26, 2
      // Predicated region
      $region21: #{tpu_custom_call.1} parent=5 // pred_check
        %p432 = pneg %p431
      $region22: #{tpu_custom_call.1} parent=5 // pred_check_branch
        %434 = sbr.rel (%p432) target = $region24
      $region23: #{tpu_custom_call.1} parent=5 // pred_region
        // Predicated region
        $region25: #{tpu_custom_call.1} parent=23 // pred_check
          %p435 = pneg %p88
        $region26: #{tpu_custom_call.1} parent=23 // pred_check_branch
          %437 = sbr.rel (%p435) target = $region28
        $region27: #{tpu_custom_call.1} parent=23 // pred_region
          %p438 = scmp.lt.s32.totalorder %s26, 1
          %s439 = scalar_select %p438, %s26, 1
          %s440 = smul.addr %s439, 4
          %s441 = smul.addr %s440, 4
          %s442 = scalar_lea.vmem %s3, %s441
        $region28: #{tpu_custom_call.1} parent=23 // pred_fallthru
          _
        // Predicated region
        $region29: #{tpu_custom_call.1} parent=23 // pred_check
          %p443 = pneg %p114
        $region30: #{tpu_custom_call.1} parent=23 // pred_check_branch
          %445 = sbr.rel (%p443) target = $region32
        $region31: #{tpu_custom_call.1} parent=23 // pred_region
          %p446 = scmp.lt.s32.totalorder %s26, 1
          %s447 = scalar_select %p446, %s26, 1
          %s448 = scalar_lea.vmem %s4, %s447
        $region32: #{tpu_custom_call.1} parent=23 // pred_fallthru
          _
        // Predicated region
        $region33: #{tpu_custom_call.1} parent=23 // pred_check
          %p449 = pneg %p140
        $region34: #{tpu_custom_call.1} parent=23 // pred_check_branch
          %451 = sbr.rel (%p449) target = $region36
        $region35: #{tpu_custom_call.1} parent=23 // pred_region
          %p452 = scmp.lt.s32.totalorder %s26, 1
          %s453 = scalar_select %p452, %s26, 1
          %s454 = smul.addr %s453, 4
          %s455 = smul.addr %s454, 4
          %s456 = scalar_lea.vmem %s5, %s455
        $region36: #{tpu_custom_call.1} parent=23 // pred_fallthru
          _
        // Predicated region
        $region37: #{tpu_custom_call.1} parent=23 // pred_check
          %p457 = pneg %p166
        $region38: #{tpu_custom_call.1} parent=23 // pred_check_branch
          %459 = sbr.rel (%p457) target = $region40
        $region39: #{tpu_custom_call.1} parent=23 // pred_region
          %p460 = scmp.lt.s32.totalorder %s26, 1
          %s461 = scalar_select %p460, %s26, 1
          %s462 = scalar_lea.vmem %s6, %s461
        $region40: #{tpu_custom_call.1} parent=23 // pred_fallthru
          _
        // Predicated region
        $region41: #{tpu_custom_call.1} parent=23 // pred_check
          %p463 = pneg %p192
        $region42: #{tpu_custom_call.1} parent=23 // pred_check_branch
          %465 = sbr.rel (%p463) target = $region44
        $region43: #{tpu_custom_call.1} parent=23 // pred_region
          %p466 = scmp.lt.s32.totalorder %s26, 1
          %s467 = scalar_select %p466, %s26, 1
          %s468 = smul.addr %s467, 4
          %s469 = smul.addr %s468, 4
          %s470 = scalar_lea.vmem %s7, %s469
        $region44: #{tpu_custom_call.1} parent=23 // pred_fallthru
          _
        // Predicated region
        $region45: #{tpu_custom_call.1} parent=23 // pred_check
          %p471 = pneg %p218
        $region46: #{tpu_custom_call.1} parent=23 // pred_check_branch
          %473 = sbr.rel (%p471) target = $region48
        $region47: #{tpu_custom_call.1} parent=23 // pred_region
          %p474 = scmp.lt.s32.totalorder %s26, 1
          %s475 = scalar_select %p474, %s26, 1
          %s476 = scalar_lea.vmem %s8, %s475
        $region48: #{tpu_custom_call.1} parent=23 // pred_fallthru
          _
        // Predicated region
        $region49: #{tpu_custom_call.1} parent=23 // pred_check
          %p477 = pneg %p244
        $region50: #{tpu_custom_call.1} parent=23 // pred_check_branch
          %479 = sbr.rel (%p477) target = $region52
        $region51: #{tpu_custom_call.1} parent=23 // pred_region
          %p480 = scmp.lt.s32.totalorder %s26, 1
          %s481 = scalar_select %p480, %s26, 1
          %s482 = smul.addr %s481, 8
          %s483 = smul.addr %s482, 4
          %s484 = scalar_lea.vmem %s9, %s483
        $region52: #{tpu_custom_call.1} parent=23 // pred_fallthru
          _
        // Predicated region
        $region53: #{tpu_custom_call.1} parent=23 // pred_check
          %p485 = pneg %p270
        $region54: #{tpu_custom_call.1} parent=23 // pred_check_branch
          %487 = sbr.rel (%p485) target = $region56
        $region55: #{tpu_custom_call.1} parent=23 // pred_region
          %p488 = scmp.lt.s32.totalorder %s26, 1
          %s489 = scalar_select %p488, %s26, 1
          %s490 = scalar_lea.vmem %s10, %s489
        $region56: #{tpu_custom_call.1} parent=23 // pred_fallthru
          _
        // Predicated region
        $region57: #{tpu_custom_call.1} parent=23 // pred_check
          %p491 = pneg %p296
        $region58: #{tpu_custom_call.1} parent=23 // pred_check_branch
          %493 = sbr.rel (%p491) target = $region60
        $region59: #{tpu_custom_call.1} parent=23 // pred_region
          %s494 = sand.u32 %s26, 1
          %s495 = scalar_lea.sflag [#allocation8], %s494
          %s496 = sand.u32 %s286, 1
          %s497 = scalar_lea.vmem [#allocation7], %s496
          %499 = vsyncadd %s495, 0
          %s500 = scalar_lea.hbm %s11, %s26
          %s502 = sshll.u32 %s500, 4
          %s503 = int_to_ptr.hbm [resolvable:$true] %s502
          %s504 = sshll.u32 %s497, 4
          %s505 = int_to_ptr.vmem [resolvable:$true] %s504
          %507 = dma.hbm_to_vmem [thread:$0]  %s503, 16, %s505, %s495
        $region60: #{tpu_custom_call.1} parent=23 // pred_fallthru
          _
        // Predicated region
        $region61: #{tpu_custom_call.1} parent=23 // pred_check
          %p508 = pneg %p322
        $region62: #{tpu_custom_call.1} parent=23 // pred_check_branch
          %510 = sbr.rel (%p508) target = $region64
        $region63: #{tpu_custom_call.1} parent=23 // pred_region
          %p511 = scmp.lt.s32.totalorder %s26, 1
          %s512 = scalar_select %p511, %s26, 1
          %s513 = scalar_lea.vmem %s12, %s512
        $region64: #{tpu_custom_call.1} parent=23 // pred_fallthru
          _
        // Predicated region
        $region65: #{tpu_custom_call.1} parent=23 // pred_check
          %p514 = pneg %p348
        $region66: #{tpu_custom_call.1} parent=23 // pred_check_branch
          %516 = sbr.rel (%p514) target = $region68
        $region67: #{tpu_custom_call.1} parent=23 // pred_region
          %s517 = sand.u32 %s26, 1
          %s518 = scalar_lea.sflag [#allocation8], %s517
          %s519 = sand.u32 %s338, 1
          %s520 = scalar_lea.vmem [#allocation9], %s519
          %522 = vsyncadd %s518, 0
          %s523 = scalar_lea.hbm %s13, %s26
          %s525 = sshll.u32 %s523, 4
          %s526 = int_to_ptr.hbm [resolvable:$true] %s525
          %s527 = sshll.u32 %s520, 4
          %s528 = int_to_ptr.vmem [resolvable:$true] %s527
          %530 = dma.hbm_to_vmem [thread:$0]  %s526, 16, %s528, %s518
        $region68: #{tpu_custom_call.1} parent=23 // pred_fallthru
          _
        // Predicated region
        $region69: #{tpu_custom_call.1} parent=23 // pred_check
          %p531 = pneg %p374
        $region70: #{tpu_custom_call.1} parent=23 // pred_check_branch
          %533 = sbr.rel (%p531) target = $region72
        $region71: #{tpu_custom_call.1} parent=23 // pred_region
          %p534 = scmp.lt.s32.totalorder %s26, 1
          %s535 = scalar_select %p534, %s26, 1
          %s536 = scalar_lea.vmem %s14, %s535
        $region72: #{tpu_custom_call.1} parent=23 // pred_fallthru
          _
      $region24: #{tpu_custom_call.1} parent=5 // pred_fallthru
        _
      %p537 = scmp.le.s32.totalorder 1, %s26
      %p538 = scmp.lt.s32.totalorder %s26, 3
      %p539 = pnand %p537, %p538
      %p540 = pneg %p539
      // Predicated region
      $region73: #{tpu_custom_call.1} parent=5 // pred_check
        _
      $region74: #{tpu_custom_call.1} parent=5 // pred_check_branch
        %542 = sbr.rel (%p539) target = $region76
      $region75: #{tpu_custom_call.1} parent=5 // pred_region
        %s543 = ssub.s32 %s26, 1
        // Predicated region
        $region77: #{tpu_custom_call.1} parent=75 // pred_check
          %p544 = pneg %p47
        $region78: #{tpu_custom_call.1} parent=75 // pred_check_branch
          %546 = sbr.rel (%p544) target = $region80
        $region79: #{tpu_custom_call.1} parent=75 // pred_region
          %548 = dma.done [#allocation5], 16
        $region80: #{tpu_custom_call.1} parent=75 // pred_fallthru
          _
        %s549 = sand.u32 %s31, 1
        %s550 = scalar_lea.sflag [#allocation8], %s549
        %s551 = sand.u32 %s289, 1
        %s552 = scalar_lea.vmem [#allocation7], %s551
        // Predicated region
        $region81: #{tpu_custom_call.1} parent=75 // pred_check
          %p553 = pneg %p302
        $region82: #{tpu_custom_call.1} parent=75 // pred_check_branch
          %555 = sbr.rel (%p553) target = $region84
        $region83: #{tpu_custom_call.1} parent=75 // pred_region
          %557 = dma.done %s550, 16
        $region84: #{tpu_custom_call.1} parent=75 // pred_fallthru
          _
        %s558 = sand.u32 %s31, 1
        %s559 = scalar_lea.sflag [#allocation8], %s558
        %s560 = sand.u32 %s341, 1
        %s561 = scalar_lea.vmem [#allocation9], %s560
        // Predicated region
        $region85: #{tpu_custom_call.1} parent=75 // pred_check
          %p562 = pneg %p354
        $region86: #{tpu_custom_call.1} parent=75 // pred_check_branch
          %564 = sbr.rel (%p562) target = $region88
        $region87: #{tpu_custom_call.1} parent=75 // pred_region
          %566 = dma.done %s559, 16
        $region88: #{tpu_custom_call.1} parent=75 // pred_fallthru
          _
        %p567 = pneg %p47
        %p568 = pneg %p44
        %p569 = pneg %p68
        %p570 = pneg %p65
        %p571 = scmp.lt.s32.totalorder %s31, 1
        %s572 = scalar_select %p571, %s31, 1
        %s573 = smul.addr %s572, 4
        %s574 = smul.addr %s573, 4
        %s575 = scalar_lea.vmem %s3, %s574
        %p576 = pneg %p94
        %p577 = pneg %p91
        %p578 = scmp.lt.s32.totalorder %s31, 1
        %s579 = scalar_select %p578, %s31, 1
        %s580 = scalar_lea.vmem %s4, %s579
        %p581 = pneg %p120
        %p582 = pneg %p117
        %p583 = scmp.lt.s32.totalorder %s31, 1
        %s584 = scalar_select %p583, %s31, 1
        %s585 = smul.addr %s584, 4
        %s586 = smul.addr %s585, 4
        %s587 = scalar_lea.vmem %s5, %s586
        %p588 = pneg %p146
        %p589 = pneg %p143
        %p590 = scmp.lt.s32.totalorder %s31, 1
        %s591 = scalar_select %p590, %s31, 1
        %s592 = scalar_lea.vmem %s6, %s591
        %p593 = pneg %p172
        %p594 = pneg %p169
        %p595 = scmp.lt.s32.totalorder %s31, 1
        %s596 = scalar_select %p595, %s31, 1
        %s597 = smul.addr %s596, 4
        %s598 = smul.addr %s597, 4
        %s599 = scalar_lea.vmem %s7, %s598
        %p600 = pneg %p198
        %p601 = pneg %p195
        %p602 = scmp.lt.s32.totalorder %s31, 1
        %s603 = scalar_select %p602, %s31, 1
        %s604 = scalar_lea.vmem %s8, %s603
        %p605 = pneg %p224
        %p606 = pneg %p221
        %p607 = scmp.lt.s32.totalorder %s31, 1
        %s608 = scalar_select %p607, %s31, 1
        %s609 = smul.addr %s608, 8
        %s610 = smul.addr %s609, 4
        %s611 = scalar_lea.vmem %s9, %s610
        %p612 = pneg %p250
        %p613 = pneg %p247
        %p614 = scmp.lt.s32.totalorder %s31, 1
        %s615 = scalar_select %p614, %s31, 1
        %s616 = scalar_lea.vmem %s10, %s615
        %p617 = pneg %p276
        %p618 = pneg %p273
        %s619 = sand.u32 %s31, 1
        %s620 = scalar_lea.sflag [#allocation8], %s619
        %s621 = sand.u32 %s289, 1
        %s622 = scalar_lea.vmem [#allocation7], %s621
        %p623 = pneg %p302
        %p624 = pneg %p299
        %p625 = scmp.lt.s32.totalorder %s31, 1
        %s626 = scalar_select %p625, %s31, 1
        %s627 = scalar_lea.vmem %s12, %s626
        %p628 = pneg %p328
        %p629 = pneg %p325
        %s630 = sand.u32 %s31, 1
        %s631 = scalar_lea.sflag [#allocation8], %s630
        %s632 = sand.u32 %s341, 1
        %s633 = scalar_lea.vmem [#allocation9], %s632
        %p634 = pneg %p354
        %p635 = pneg %p351
        %p636 = scmp.lt.s32.totalorder %s31, 1
        %s637 = scalar_select %p636, %s31, 1
        %s638 = scalar_lea.vmem %s14, %s637
        %p639 = pneg %p380
        %p640 = pneg %p377
        %p641 = pneg %p401
        %p642 = pneg %p398
        %p643 = scmp.lt.s32.totalorder %s31, 1
        %s644 = scalar_select %p643, %s31, 1
        %s645 = smul.addr %s644, 4
        %s646 = smul.addr %s645, 4
        %s647 = scalar_lea.vmem %s3, %s646
        %p648 = scmp.lt.s32.totalorder %s31, 1
        %s649 = scalar_select %p648, %s31, 1
        %s650 = scalar_lea.vmem %s4, %s649
        %p651 = scmp.lt.s32.totalorder %s31, 1
        %s652 = scalar_select %p651, %s31, 1
        %s653 = smul.addr %s652, 4
        %s654 = smul.addr %s653, 4
        %s655 = scalar_lea.vmem %s5, %s654
        %p656 = scmp.lt.s32.totalorder %s31, 1
        %s657 = scalar_select %p656, %s31, 1
        %s658 = scalar_lea.vmem %s6, %s657
        %p659 = scmp.lt.s32.totalorder %s31, 1
        %s660 = scalar_select %p659, %s31, 1
        %s661 = smul.addr %s660, 4
        %s662 = smul.addr %s661, 4
        %s663 = scalar_lea.vmem %s7, %s662
        %p664 = scmp.lt.s32.totalorder %s31, 1
        %s665 = scalar_select %p664, %s31, 1
        %s666 = scalar_lea.vmem %s8, %s665
        %p667 = scmp.lt.s32.totalorder %s31, 1
        %s668 = scalar_select %p667, %s31, 1
        %s669 = smul.addr %s668, 8
        %s670 = smul.addr %s669, 4
        %s671 = scalar_lea.vmem %s9, %s670
        %p672 = scmp.lt.s32.totalorder %s31, 1
        %s673 = scalar_select %p672, %s31, 1
        %s674 = scalar_lea.vmem %s10, %s673
        %p675 = scmp.lt.s32.totalorder %s31, 1
        %s676 = scalar_select %p675, %s31, 1
        %s677 = scalar_lea.vmem %s12, %s676
        %p678 = scmp.lt.s32.totalorder %s31, 1
        %s679 = scalar_select %p678, %s31, 1
        %s680 = scalar_lea.vmem %s14, %s679
        %p682 = scmp.eq.s32.totalorder %s31, 0
        // Predicated region
        $region89: #{tpu_custom_call.1} parent=75 // pred_check
          %p683 = pneg %p682
        $region90: #{tpu_custom_call.1} parent=75 // pred_check_branch
          %685 = sbr.rel (%p683) target = $region92
        $region91: #{tpu_custom_call.1} parent=75 // pred_region
          // Predicated region
          $region93: #{tpu_custom_call.1} parent=91 // pred_check
            _
          $region94: #{tpu_custom_call.1} parent=91 // pred_check_branch
            %687 = sbr.rel target = $region96
          $region95: #{tpu_custom_call.1} parent=91 // pred_region
            %688 = sst [smem:[#allocation13]] [#allocation12]
            %689 = sst [smem:[#allocation14]] [#allocation11]
          $region96: #{tpu_custom_call.1} parent=91 // pred_fallthru
            _
          %691 = shalt.err (0)
          %s693 = sshll.u32 %s0, 4
          %s694 = int_to_ptr.hbm [resolvable:$true] %s693
          %s695 = sshll.u32 [#allocation2], 4
          %s696 = int_to_ptr.vmem [resolvable:$true] %s695
          %698 = dma.hbm_to_vmem [thread:$0]  %s694, 256, %s696, [#allocation3]
          %s699 = smul.u32 16, 1
          %s700 = sshll.u32 %s699, 4
          %701 = dma.done [#allocation3], %s700
          %v702 = vld [vmem:[#allocation2] sm:$0xff]
          %v703 = vld [vmem:[#allocation2 + $0x8] sm:$0xff]
          %v704 = vld [vmem:[#allocation4] sm:$0x1]
          %v705 = vld [vmem:[%s2] sm:$0x1]
          %vm706 = vcmask 261120
          %v707 = vsel %vm706, %v702, 0.0
          %708 = vadd.xlane.f32.xlu0 %v707
          %v709 = vpop.xlane.xlu0 %708
          %v710 = vsel %vm706, %v703, 0.0
          %711 = vadd.xlane.f32.xlu0 %v710
          %v712 = vpop.xlane.xlu0 %711
          %v713 = vrcp.pop 32.0
          %v714 = vmul.f32 32.0, %v713
          %v715 = vsub.f32 1.0, %v714
          %v716 = vmul.f32 %v713, %v715
          %v717 = vadd.f32 %v713, %v716
          %vm718 = vweird.f32 %v713
          %v719 = vsel %vm718, %v713, %v717
          %v720 = vmul.f32 %v709, %v719
          %v721 = vmul.f32 %v712, %v719
          %v722 = vsub.f32 %v702, %v720
          %v723 = vsub.f32 %v703, %v721
          %v724 = vmul.f32 %v722, %v722
          %v725 = vmul.f32 %v723, %v723
          %v726 = vsel %vm706, %v724, 0.0
          %727 = vadd.xlane.f32.xlu0 %v726
          %v728 = vpop.xlane.xlu0 %727
          %v729 = vsel %vm706, %v725, 0.0
          %730 = vadd.xlane.f32.xlu0 %v729
          %v731 = vpop.xlane.xlu0 %730
          %v732 = vmul.f32 %v728, %v719
          %v733 = vmul.f32 %v731, %v719
          %v734 = vadd.f32 %v732, 1e-05
          %v735 = vadd.f32 %v733, 1e-05
          %v736 = vrsqrt.pop %v734
          %v737 = vmul.f32 %v736, %v734
          %v738 = vmul.f32 %v737, %v736
          %v739 = vmul.f32 0.5, %v738
          %v740 = vsub.f32 1.5, %v739
          %v741 = vmul.f32 %v736, %v740
          %vm742 = vweird.f32 %v734
          %vm743 = vweird.f32 %v736
          %vm744 = vmor %vm742, %vm743
          %v745 = vsel %vm744, %v736, %v741
          %v746 = vrsqrt.pop %v735
          %v747 = vmul.f32 %v746, %v735
          %v748 = vmul.f32 %v747, %v746
          %v749 = vmul.f32 0.5, %v748
          %v750 = vsub.f32 1.5, %v749
          %v751 = vmul.f32 %v746, %v750
          %vm752 = vweird.f32 %v735
          %vm753 = vweird.f32 %v746
          %vm754 = vmor %vm752, %vm753
          %v755 = vsel %vm754, %v746, %v751
          %v756 = vmul.f32 %v722, %v745
          %v757 = vmul.f32 %v723, %v755
          %v759 = vperm.slane %v704, 0
          %v761 = vmul.f32 %v756, %v759
          %v762 = vmul.f32 %v757, %v759
          %v764 = vperm.slane %v705, 0
          %v766 = vadd.f32 %v761, %v764
          %v767 = vadd.f32 %v762, %v764
          %768 = vst.msk [vmem:[#allocation2] sm:$0xff] %vm706, %v766
          %769 = vst.msk [vmem:[#allocation2 + $0x8] sm:$0xff] %vm706, %v767
        $region92: #{tpu_custom_call.1} parent=75 // pred_fallthru
          _
        %v770 = vld [vmem:[#allocation2] sm:$0xff]
        %v771 = vld [vmem:[#allocation2 + $0x8] sm:$0xff]
        %v772 = vpack.c.bf16 %v771, %v770
        %v773 = vld [vmem:[%s647] sm:$0xf]
        %v774 = vld [vmem:[%s647 + $0x4] sm:$0xf]
        %v775 = vld [vmem:[%s647 + $0x8] sm:$0xf]
        %v776 = vld [vmem:[%s647 + $0xc] sm:$0xf]
        %v777 = vld [vmem:[%s650] sm:$0x1]
        %v779 = vperm.slane %v777, 0
        %v785 = vunpack.c.l.b16 %v773
        %v786 = vunpack.c.l.b16 %v774
        %v787 = vunpack.c.l.b16 %v775
        %v788 = vunpack.c.l.b16 %v776
        %v789 = vpack.c.b16 %v786, %v785
        %v790 = vpack.c.b16 %v788, %v787
        %vm793 = vcmask 261120
        %v795 = vsel %vm793, %v772, 0
        %797 = vmatpush.bf16.msra.mxu0 0
        %798 = vmatpush.bf16.msra.mxu0 0
        %799 = vmatpush.bf16.msra.mxu0 0
        %800 = vmatpush.bf16.msra.mxu0 0
        %801 = vmatpush.bf16.msra.mxu0 0
        %802 = vmatpush.bf16.msra.mxu0 0
        %803 = vmatpush.bf16.msra.mxu0 %v790
        %804 = vmatpush.bf16.msra.mxu0 %v789
        %805 = vmatmul.bf16.gmra.mxu0 %v795
        %v806 = vpop.f32.mrf.mxu0
        %v807 = vadd.f32 %v779, %v806
        %v808 = vpop.f32.mrf.mxu0
        %v809 = vadd.f32 %v779, %v808
        %810 = vdwg.mxu0
        %813 = vrot.lane.b32.xlu0 %v807, 120
        %v814 = vpop.permute.xlu0 %813
        %815 = vrot.lane.b32.xlu0 %v809, 120
        %v816 = vpop.permute.xlu0 %815
        %819 = vrot.lane.b32.xlu0 %v807, 112
        %v820 = vpop.permute.xlu0 %819
        %821 = vrot.lane.b32.xlu0 %v809, 112
        %v822 = vpop.permute.xlu0 %821
        %825 = vrot.lane.b32.xlu0 %v807, 104
        %v826 = vpop.permute.xlu0 %825
        %827 = vrot.lane.b32.xlu0 %v809, 104
        %v828 = vpop.permute.xlu0 %827
        %v831 = vpack.c.bf16 %v807, %v807
        %v832 = vpack.c.bf16 %v809, %v809
        %v833 = vpack.c.bf16 %v814, %v814
        %v834 = vpack.c.bf16 %v816, %v816
        %v835 = vpack.c.bf16 %v820, %v820
        %v836 = vpack.c.bf16 %v822, %v822
        %v837 = vpack.c.bf16 %v826, %v826
        %v838 = vpack.c.bf16 %v828, %v828
        %v840 = vunpack.c.l.b16 %v831
        %v841 = vpack.c.b16 %v840, %v840
        %842 = vrot.lane.b32.xlu0 %v841, 96
        %v843 = vpop.permute.xlu0 %842
        %vm844 = vcmask 64512
        %v846 = vsel %vm844, %v831, 0
        %v849 = vsel %vm844, %v843, 0
        %851 = vmatpush.bf16.xpose.msra.mxu0 0
        %852 = vmatpush.bf16.xpose.msra.mxu0 0
        %853 = vmatpush.bf16.xpose.msra.mxu0 0
        %854 = vmatpush.bf16.xpose.msra.mxu0 0
        %855 = vmatpush.bf16.xpose.msra.mxu0 0
        %856 = vmatpush.bf16.xpose.msra.mxu0 0
        %857 = vmatpush.bf16.xpose.msra.mxu0 0
        %858 = vmatpush.bf16.xpose.msra.mxu0 %v849
        %859 = vmatmul.bf16.gmra.mxu0 %v846
        %v860 = vpop.f32.mrf.mxu0
        %v861 = vadd.f32 0.0, %v860
        %v862 = vpop.f32.mrf.mxu0
        %863 = vdwg.mxu0
        %v865 = vunpack.c.l.b16 %v832
        %v866 = vpack.c.b16 %v865, %v865
        %867 = vrot.lane.b32.xlu0 %v866, 96
        %v868 = vpop.permute.xlu0 %867
        %v870 = vsel %vm844, %v832, 0
        %v873 = vsel %vm844, %v868, 0
        %875 = vmatpush.bf16.xpose.msra.mxu0 0
        %876 = vmatpush.bf16.xpose.msra.mxu0 0
        %877 = vmatpush.bf16.xpose.msra.mxu0 0
        %878 = vmatpush.bf16.xpose.msra.mxu0 0
        %879 = vmatpush.bf16.xpose.msra.mxu0 0
        %880 = vmatpush.bf16.xpose.msra.mxu0 0
        %881 = vmatpush.bf16.xpose.msra.mxu0 0
        %882 = vmatpush.bf16.xpose.msra.mxu0 %v873
        %883 = vmatmul.bf16.gmra.mxu0 %v870
        %v884 = vpop.f32.mrf.mxu0
        %v885 = vadd.f32 0.0, %v884
        %v886 = vpop.f32.mrf.mxu0
        %887 = vdwg.mxu0
        %v889 = vunpack.c.l.b16 %v833
        %v890 = vpack.c.b16 %v889, %v889
        %891 = vrot.lane.b32.xlu0 %v890, 96
        %v892 = vpop.permute.xlu0 %891
        %v894 = vsel %vm844, %v833, 0
        %v897 = vsel %vm844, %v892, 0
        %899 = vmatpush.bf16.xpose.msra.mxu0 0
        %900 = vmatpush.bf16.xpose.msra.mxu0 0
        %901 = vmatpush.bf16.xpose.msra.mxu0 0
        %902 = vmatpush.bf16.xpose.msra.mxu0 0
        %903 = vmatpush.bf16.xpose.msra.mxu0 0
        %904 = vmatpush.bf16.xpose.msra.mxu0 0
        %905 = vmatpush.bf16.xpose.msra.mxu0 0
        %906 = vmatpush.bf16.xpose.msra.mxu0 %v897
        %907 = vmatmul.bf16.gmra.mxu0 %v894
        %v908 = vpop.f32.mrf.mxu0
        %v909 = vadd.f32 0.0, %v908
        %v910 = vpop.f32.mrf.mxu0
        %911 = vdwg.mxu0
        %v913 = vunpack.c.l.b16 %v834
        %v914 = vpack.c.b16 %v913, %v913
        %915 = vrot.lane.b32.xlu0 %v914, 96
        %v916 = vpop.permute.xlu0 %915
        %v918 = vsel %vm844, %v834, 0
        %v921 = vsel %vm844, %v916, 0
        %923 = vmatpush.bf16.xpose.msra.mxu0 0
        %924 = vmatpush.bf16.xpose.msra.mxu0 0
        %925 = vmatpush.bf16.xpose.msra.mxu0 0
        %926 = vmatpush.bf16.xpose.msra.mxu0 0
        %927 = vmatpush.bf16.xpose.msra.mxu0 0
        %928 = vmatpush.bf16.xpose.msra.mxu0 0
        %929 = vmatpush.bf16.xpose.msra.mxu0 0
        %930 = vmatpush.bf16.xpose.msra.mxu0 %v921
        %931 = vmatmul.bf16.gmra.mxu0 %v918
        %v932 = vpop.f32.mrf.mxu0
        %v933 = vadd.f32 0.0, %v932
        %v934 = vpop.f32.mrf.mxu0
        %935 = vdwg.mxu0
        %v937 = vunpack.c.l.b16 %v835
        %v938 = vpack.c.b16 %v937, %v937
        %939 = vrot.lane.b32.xlu0 %v938, 96
        %v940 = vpop.permute.xlu0 %939
        %v942 = vsel %vm844, %v835, 0
        %v945 = vsel %vm844, %v940, 0
        %947 = vmatpush.bf16.xpose.msra.mxu0 0
        %948 = vmatpush.bf16.xpose.msra.mxu0 0
        %949 = vmatpush.bf16.xpose.msra.mxu0 0
        %950 = vmatpush.bf16.xpose.msra.mxu0 0
        %951 = vmatpush.bf16.xpose.msra.mxu0 0
        %952 = vmatpush.bf16.xpose.msra.mxu0 0
        %953 = vmatpush.bf16.xpose.msra.mxu0 0
        %954 = vmatpush.bf16.xpose.msra.mxu0 %v945
        %955 = vmatmul.bf16.gmra.mxu0 %v942
        %v956 = vpop.f32.mrf.mxu0
        %v957 = vadd.f32 0.0, %v956
        %v958 = vpop.f32.mrf.mxu0
        %959 = vdwg.mxu0
        %v961 = vunpack.c.l.b16 %v836
        %v962 = vpack.c.b16 %v961, %v961
        %963 = vrot.lane.b32.xlu0 %v962, 96
        %v964 = vpop.permute.xlu0 %963
        %v966 = vsel %vm844, %v836, 0
        %v969 = vsel %vm844, %v964, 0
        %971 = vmatpush.bf16.xpose.msra.mxu0 0
        %972 = vmatpush.bf16.xpose.msra.mxu0 0
        %973 = vmatpush.bf16.xpose.msra.mxu0 0
        %974 = vmatpush.bf16.xpose.msra.mxu0 0
        %975 = vmatpush.bf16.xpose.msra.mxu0 0
        %976 = vmatpush.bf16.xpose.msra.mxu0 0
        %977 = vmatpush.bf16.xpose.msra.mxu0 0
        %978 = vmatpush.bf16.xpose.msra.mxu0 %v969
        %979 = vmatmul.bf16.gmra.mxu0 %v966
        %v980 = vpop.f32.mrf.mxu0
        %v981 = vadd.f32 0.0, %v980
        %v982 = vpop.f32.mrf.mxu0
        %983 = vdwg.mxu0
        %v985 = vunpack.c.l.b16 %v837
        %v986 = vpack.c.b16 %v985, %v985
        %987 = vrot.lane.b32.xlu0 %v986, 96
        %v988 = vpop.permute.xlu0 %987
        %v990 = vsel %vm844, %v837, 0
        %v993 = vsel %vm844, %v988, 0
        %995 = vmatpush.bf16.xpose.msra.mxu0 0
        %996 = vmatpush.bf16.xpose.msra.mxu0 0
        %997 = vmatpush.bf16.xpose.msra.mxu0 0
        %998 = vmatpush.bf16.xpose.msra.mxu0 0
        %999 = vmatpush.bf16.xpose.msra.mxu0 0
        %1000 = vmatpush.bf16.xpose.msra.mxu0 0
        %1001 = vmatpush.bf16.xpose.msra.mxu0 0
        %1002 = vmatpush.bf16.xpose.msra.mxu0 %v993
        %1003 = vmatmul.bf16.gmra.mxu0 %v990
        %v1004 = vpop.f32.mrf.mxu0
        %v1005 = vadd.f32 0.0, %v1004
        %v1006 = vpop.f32.mrf.mxu0
        %1007 = vdwg.mxu0
        %v1009 = vunpack.c.l.b16 %v838
        %v1010 = vpack.c.b16 %v1009, %v1009
        %1011 = vrot.lane.b32.xlu0 %v1010, 96
        %v1012 = vpop.permute.xlu0 %1011
        %v1014 = vsel %vm844, %v838, 0
        %v1017 = vsel %vm844, %v1012, 0
        %1019 = vmatpush.bf16.xpose.msra.mxu0 0
        %1020 = vmatpush.bf16.xpose.msra.mxu0 0
        %1021 = vmatpush.bf16.xpose.msra.mxu0 0
        %1022 = vmatpush.bf16.xpose.msra.mxu0 0
        %1023 = vmatpush.bf16.xpose.msra.mxu0 0
        %1024 = vmatpush.bf16.xpose.msra.mxu0 0
        %1025 = vmatpush.bf16.xpose.msra.mxu0 0
        %1026 = vmatpush.bf16.xpose.msra.mxu0 %v1017
        %1027 = vmatmul.bf16.gmra.mxu0 %v1014
        %v1028 = vpop.f32.mrf.mxu0
        %v1029 = vadd.f32 0.0, %v1028
        %v1030 = vpop.f32.mrf.mxu0
        %1031 = vdwg.mxu0
        %v1032 = vmul.f32 %v861, 0.35355338
        %v1033 = vmul.f32 %v885, 0.35355338
        %v1034 = vmul.f32 %v909, 0.35355338
        %v1035 = vmul.f32 %v933, 0.35355338
        %v1036 = vmul.f32 %v957, 0.35355338
        %v1037 = vmul.f32 %v981, 0.35355338
        %v1038 = vmul.f32 %v1005, 0.35355338
        %v1039 = vmul.f32 %v1029, 0.35355338
        %v1040 = vsel %vm844, %v1032, -inf
        %1041 = vmax.xlane.f32.xlu0 %v1040
        %v1042 = vpop.xlane.xlu0 %1041
        %v1043 = vsel %vm844, %v1033, -inf
        %1044 = vmax.xlane.f32.xlu0 %v1043
        %v1045 = vpop.xlane.xlu0 %1044
        %v1046 = vsel %vm844, %v1034, -inf
        %1047 = vmax.xlane.f32.xlu0 %v1046
        %v1048 = vpop.xlane.xlu0 %1047
        %v1049 = vsel %vm844, %v1035, -inf
        %1050 = vmax.xlane.f32.xlu0 %v1049
        %v1051 = vpop.xlane.xlu0 %1050
        %v1052 = vsel %vm844, %v1036, -inf
        %1053 = vmax.xlane.f32.xlu0 %v1052
        %v1054 = vpop.xlane.xlu0 %1053
        %v1055 = vsel %vm844, %v1037, -inf
        %1056 = vmax.xlane.f32.xlu0 %v1055
        %v1057 = vpop.xlane.xlu0 %1056
        %v1058 = vsel %vm844, %v1038, -inf
        %1059 = vmax.xlane.f32.xlu0 %v1058
        %v1060 = vpop.xlane.xlu0 %1059
        %v1061 = vsel %vm844, %v1039, -inf
        %1062 = vmax.xlane.f32.xlu0 %v1061
        %v1063 = vpop.xlane.xlu0 %1062
        %v1064 = vsub.f32 %v1032, %v1042
        %v1065 = vsub.f32 %v1033, %v1045
        %v1066 = vsub.f32 %v1034, %v1048
        %v1067 = vsub.f32 %v1035, %v1051
        %v1068 = vsub.f32 %v1036, %v1054
        %v1069 = vsub.f32 %v1037, %v1057
        %v1070 = vsub.f32 %v1038, %v1060
        %v1071 = vsub.f32 %v1039, %v1063
        %v1072 = vmul.f32 %v1064, 1.442695
        %v1073 = vpow.pop %v1072
        %v1074 = vmul.f32 %v1065, 1.442695
        %v1075 = vpow.pop %v1074
        %v1076 = vmul.f32 %v1066, 1.442695
        %v1077 = vpow.pop %v1076
        %v1078 = vmul.f32 %v1067, 1.442695
        %v1079 = vpow.pop %v1078
        %v1080 = vmul.f32 %v1068, 1.442695
        %v1081 = vpow.pop %v1080
        %v1082 = vmul.f32 %v1069, 1.442695
        %v1083 = vpow.pop %v1082
        %v1084 = vmul.f32 %v1070, 1.442695
        %v1085 = vpow.pop %v1084
        %v1086 = vmul.f32 %v1071, 1.442695
        %v1087 = vpow.pop %v1086
        %v1088 = vsel %vm844, %v1073, 0.0
        %1089 = vadd.xlane.f32.xlu0 %v1088
        %v1090 = vpop.xlane.xlu0 %1089
        %v1091 = vsel %vm844, %v1075, 0.0
        %1092 = vadd.xlane.f32.xlu0 %v1091
        %v1093 = vpop.xlane.xlu0 %1092
        %v1094 = vsel %vm844, %v1077, 0.0
        %1095 = vadd.xlane.f32.xlu0 %v1094
        %v1096 = vpop.xlane.xlu0 %1095
        %v1097 = vsel %vm844, %v1079, 0.0
        %1098 = vadd.xlane.f32.xlu0 %v1097
        %v1099 = vpop.xlane.xlu0 %1098
        %v1100 = vsel %vm844, %v1081, 0.0
        %1101 = vadd.xlane.f32.xlu0 %v1100
        %v1102 = vpop.xlane.xlu0 %1101
        %v1103 = vsel %vm844, %v1083, 0.0
        %1104 = vadd.xlane.f32.xlu0 %v1103
        %v1105 = vpop.xlane.xlu0 %1104
        %v1106 = vsel %vm844, %v1085, 0.0
        %1107 = vadd.xlane.f32.xlu0 %v1106
        %v1108 = vpop.xlane.xlu0 %1107
        %v1109 = vsel %vm844, %v1087, 0.0
        %1110 = vadd.xlane.f32.xlu0 %v1109
        %v1111 = vpop.xlane.xlu0 %1110
        %v1112 = vrcp.pop %v1090
        %v1113 = vmul.f32 %v1090, %v1112
        %v1114 = vsub.f32 1.0, %v1113
        %v1115 = vmul.f32 %v1112, %v1114
        %v1116 = vadd.f32 %v1112, %v1115
        %vm1117 = vweird.f32 %v1090
        %vm1118 = vweird.f32 %v1112
        %vm1119 = vmor %vm1117, %vm1118
        %v1120 = vsel %vm1119, %v1112, %v1116
        %v1121 = vand.u32 2147483647, %v1090
        %vm1122 = vcmp.eq.f32.partialorder %v1121, 8.507059e+37
        %v1123 = vand.u32 %v1090, 2147483648
        %v1124 = vor.u32 1.1754944e-38, %v1123
        %v1125 = vsel %vm1122, %v1124, %v1120
        %v1126 = vmul.f32 %v1073, %v1125
        %v1127 = vrcp.pop %v1093
        %v1128 = vmul.f32 %v1093, %v1127
        %v1129 = vsub.f32 1.0, %v1128
        %v1130 = vmul.f32 %v1127, %v1129
        %v1131 = vadd.f32 %v1127, %v1130
        %vm1132 = vweird.f32 %v1093
        %vm1133 = vweird.f32 %v1127
        %vm1134 = vmor %vm1132, %vm1133
        %v1135 = vsel %vm1134, %v1127, %v1131
        %v1136 = vand.u32 2147483647, %v1093
        %vm1137 = vcmp.eq.f32.partialorder %v1136, 8.507059e+37
        %v1138 = vand.u32 %v1093, 2147483648
        %v1139 = vor.u32 1.1754944e-38, %v1138
        %v1140 = vsel %vm1137, %v1139, %v1135
        %v1141 = vmul.f32 %v1075, %v1140
        %v1142 = vrcp.pop %v1096
        %v1143 = vmul.f32 %v1096, %v1142
        %v1144 = vsub.f32 1.0, %v1143
        %v1145 = vmul.f32 %v1142, %v1144
        %v1146 = vadd.f32 %v1142, %v1145
        %vm1147 = vweird.f32 %v1096
        %vm1148 = vweird.f32 %v1142
        %vm1149 = vmor %vm1147, %vm1148
        %v1150 = vsel %vm1149, %v1142, %v1146
        %v1151 = vand.u32 2147483647, %v1096
        %vm1152 = vcmp.eq.f32.partialorder %v1151, 8.507059e+37
        %v1153 = vand.u32 %v1096, 2147483648
        %v1154 = vor.u32 1.1754944e-38, %v1153
        %v1155 = vsel %vm1152, %v1154, %v1150
        %v1156 = vmul.f32 %v1077, %v1155
        %v1157 = vrcp.pop %v1099
        %v1158 = vmul.f32 %v1099, %v1157
        %v1159 = vsub.f32 1.0, %v1158
        %v1160 = vmul.f32 %v1157, %v1159
        %v1161 = vadd.f32 %v1157, %v1160
        %vm1162 = vweird.f32 %v1099
        %vm1163 = vweird.f32 %v1157
        %vm1164 = vmor %vm1162, %vm1163
        %v1165 = vsel %vm1164, %v1157, %v1161
        %v1166 = vand.u32 2147483647, %v1099
        %vm1167 = vcmp.eq.f32.partialorder %v1166, 8.507059e+37
        %v1168 = vand.u32 %v1099, 2147483648
        %v1169 = vor.u32 1.1754944e-38, %v1168
        %v1170 = vsel %vm1167, %v1169, %v1165
        %v1171 = vmul.f32 %v1079, %v1170
        %v1172 = vrcp.pop %v1102
        %v1173 = vmul.f32 %v1102, %v1172
        %v1174 = vsub.f32 1.0, %v1173
        %v1175 = vmul.f32 %v1172, %v1174
        %v1176 = vadd.f32 %v1172, %v1175
        %vm1177 = vweird.f32 %v1102
        %vm1178 = vweird.f32 %v1172
        %vm1179 = vmor %vm1177, %vm1178
        %v1180 = vsel %vm1179, %v1172, %v1176
        %v1181 = vand.u32 2147483647, %v1102
        %vm1182 = vcmp.eq.f32.partialorder %v1181, 8.507059e+37
        %v1183 = vand.u32 %v1102, 2147483648
        %v1184 = vor.u32 1.1754944e-38, %v1183
        %v1185 = vsel %vm1182, %v1184, %v1180
        %v1186 = vmul.f32 %v1081, %v1185
        %v1187 = vrcp.pop %v1105
        %v1188 = vmul.f32 %v1105, %v1187
        %v1189 = vsub.f32 1.0, %v1188
        %v1190 = vmul.f32 %v1187, %v1189
        %v1191 = vadd.f32 %v1187, %v1190
        %vm1192 = vweird.f32 %v1105
        %vm1193 = vweird.f32 %v1187
        %vm1194 = vmor %vm1192, %vm1193
        %v1195 = vsel %vm1194, %v1187, %v1191
        %v1196 = vand.u32 2147483647, %v1105
        %vm1197 = vcmp.eq.f32.partialorder %v1196, 8.507059e+37
        %v1198 = vand.u32 %v1105, 2147483648
        %v1199 = vor.u32 1.1754944e-38, %v1198
        %v1200 = vsel %vm1197, %v1199, %v1195
        %v1201 = vmul.f32 %v1083, %v1200
        %v1202 = vrcp.pop %v1108
        %v1203 = vmul.f32 %v1108, %v1202
        %v1204 = vsub.f32 1.0, %v1203
        %v1205 = vmul.f32 %v1202, %v1204
        %v1206 = vadd.f32 %v1202, %v1205
        %vm1207 = vweird.f32 %v1108
        %vm1208 = vweird.f32 %v1202
        %vm1209 = vmor %vm1207, %vm1208
        %v1210 = vsel %vm1209, %v1202, %v1206
        %v1211 = vand.u32 2147483647, %v1108
        %vm1212 = vcmp.eq.f32.partialorder %v1211, 8.507059e+37
        %v1213 = vand.u32 %v1108, 2147483648
        %v1214 = vor.u32 1.1754944e-38, %v1213
        %v1215 = vsel %vm1212, %v1214, %v1210
        %v1216 = vmul.f32 %v1085, %v1215
        %v1217 = vrcp.pop %v1111
        %v1218 = vmul.f32 %v1111, %v1217
        %v1219 = vsub.f32 1.0, %v1218
        %v1220 = vmul.f32 %v1217, %v1219
        %v1221 = vadd.f32 %v1217, %v1220
        %vm1222 = vweird.f32 %v1111
        %vm1223 = vweird.f32 %v1217
        %vm1224 = vmor %vm1222, %vm1223
        %v1225 = vsel %vm1224, %v1217, %v1221
        %v1226 = vand.u32 2147483647, %v1111
        %vm1227 = vcmp.eq.f32.partialorder %v1226, 8.507059e+37
        %v1228 = vand.u32 %v1111, 2147483648
        %v1229 = vor.u32 1.1754944e-38, %v1228
        %v1230 = vsel %vm1227, %v1229, %v1225
        %v1231 = vmul.f32 %v1087, %v1230
        %v1232 = vpack.c.bf16 %v1126, %v1126
        %v1233 = vpack.c.bf16 %v1141, %v1141
        %v1234 = vpack.c.bf16 %v1156, %v1156
        %v1235 = vpack.c.bf16 %v1171, %v1171
        %v1236 = vpack.c.bf16 %v1186, %v1186
        %v1237 = vpack.c.bf16 %v1201, %v1201
        %v1238 = vpack.c.bf16 %v1216, %v1216
        %v1239 = vpack.c.bf16 %v1231, %v1231
        %1240 = vrot.lane.b32.xlu0 %v841, 64
        %v1241 = vpop.permute.xlu0 %1240
        %v1243 = vsel %vm844, %v1232, 0
        %vm1245 = vcmask 1043456
        %v1247 = vsel %vm1245, %v1241, 0
        %1249 = vmatpush.bf16.msra.mxu0 0
        %1250 = vmatpush.bf16.msra.mxu0 0
        %1251 = vmatpush.bf16.msra.mxu0 0
        %1252 = vmatpush.bf16.msra.mxu0 0
        %1253 = vmatpush.bf16.msra.mxu0 0
        %1254 = vmatpush.bf16.msra.mxu0 0
        %1255 = vmatpush.bf16.msra.mxu0 0
        %1256 = vmatpush.bf16.msra.mxu0 %v1247
        %1257 = vmatmul.bf16.gmra.mxu0 %v1243
        %v1258 = vpop.f32.mrf.mxu0
        %v1259 = vadd.f32 0.0, %v1258
        %v1260 = vpop.f32.mrf.mxu0
        %1261 = vdwg.mxu0
        %1262 = vrot.lane.b32.xlu0 %v866, 64
        %v1263 = vpop.permute.xlu0 %1262
        %v1265 = vsel %vm844, %v1233, 0
        %v1268 = vsel %vm1245, %v1263, 0
        %1270 = vmatpush.bf16.msra.mxu0 0
        %1271 = vmatpush.bf16.msra.mxu0 0
        %1272 = vmatpush.bf16.msra.mxu0 0
        %1273 = vmatpush.bf16.msra.mxu0 0
        %1274 = vmatpush.bf16.msra.mxu0 0
        %1275 = vmatpush.bf16.msra.mxu0 0
        %1276 = vmatpush.bf16.msra.mxu0 0
        %1277 = vmatpush.bf16.msra.mxu0 %v1268
        %1278 = vmatmul.bf16.gmra.mxu0 %v1265
        %v1279 = vpop.f32.mrf.mxu0
        %v1280 = vadd.f32 0.0, %v1279
        %v1281 = vpop.f32.mrf.mxu0
        %1282 = vdwg.mxu0
        %1283 = vrot.lane.b32.xlu0 %v890, 64
        %v1284 = vpop.permute.xlu0 %1283
        %v1286 = vsel %vm844, %v1234, 0
        %v1289 = vsel %vm1245, %v1284, 0
        %1291 = vmatpush.bf16.msra.mxu0 0
        %1292 = vmatpush.bf16.msra.mxu0 0
        %1293 = vmatpush.bf16.msra.mxu0 0
        %1294 = vmatpush.bf16.msra.mxu0 0
        %1295 = vmatpush.bf16.msra.mxu0 0
        %1296 = vmatpush.bf16.msra.mxu0 0
        %1297 = vmatpush.bf16.msra.mxu0 0
        %1298 = vmatpush.bf16.msra.mxu0 %v1289
        %1299 = vmatmul.bf16.gmra.mxu0 %v1286
        %v1300 = vpop.f32.mrf.mxu0
        %v1301 = vadd.f32 0.0, %v1300
        %v1302 = vpop.f32.mrf.mxu0
        %1303 = vdwg.mxu0
        %1304 = vrot.lane.b32.xlu0 %v914, 64
        %v1305 = vpop.permute.xlu0 %1304
        %v1307 = vsel %vm844, %v1235, 0
        %v1310 = vsel %vm1245, %v1305, 0
        %1312 = vmatpush.bf16.msra.mxu0 0
        %1313 = vmatpush.bf16.msra.mxu0 0
        %1314 = vmatpush.bf16.msra.mxu0 0
        %1315 = vmatpush.bf16.msra.mxu0 0
        %1316 = vmatpush.bf16.msra.mxu0 0
        %1317 = vmatpush.bf16.msra.mxu0 0
        %1318 = vmatpush.bf16.msra.mxu0 0
        %1319 = vmatpush.bf16.msra.mxu0 %v1310
        %1320 = vmatmul.bf16.gmra.mxu0 %v1307
        %v1321 = vpop.f32.mrf.mxu0
        %v1322 = vadd.f32 0.0, %v1321
        %v1323 = vpop.f32.mrf.mxu0
        %1324 = vdwg.mxu0
        %1325 = vrot.lane.b32.xlu0 %v938, 64
        %v1326 = vpop.permute.xlu0 %1325
        %v1328 = vsel %vm844, %v1236, 0
        %v1331 = vsel %vm1245, %v1326, 0
        %1333 = vmatpush.bf16.msra.mxu0 0
        %1334 = vmatpush.bf16.msra.mxu0 0
        %1335 = vmatpush.bf16.msra.mxu0 0
        %1336 = vmatpush.bf16.msra.mxu0 0
        %1337 = vmatpush.bf16.msra.mxu0 0
        %1338 = vmatpush.bf16.msra.mxu0 0
        %1339 = vmatpush.bf16.msra.mxu0 0
        %1340 = vmatpush.bf16.msra.mxu0 %v1331
        %1341 = vmatmul.bf16.gmra.mxu0 %v1328
        %v1342 = vpop.f32.mrf.mxu0
        %v1343 = vadd.f32 0.0, %v1342
        %v1344 = vpop.f32.mrf.mxu0
        %1345 = vdwg.mxu0
        %1346 = vrot.lane.b32.xlu0 %v962, 64
        %v1347 = vpop.permute.xlu0 %1346
        %v1349 = vsel %vm844, %v1237, 0
        %v1352 = vsel %vm1245, %v1347, 0
        %1354 = vmatpush.bf16.msra.mxu0 0
        %1355 = vmatpush.bf16.msra.mxu0 0
        %1356 = vmatpush.bf16.msra.mxu0 0
        %1357 = vmatpush.bf16.msra.mxu0 0
        %1358 = vmatpush.bf16.msra.mxu0 0
        %1359 = vmatpush.bf16.msra.mxu0 0
        %1360 = vmatpush.bf16.msra.mxu0 0
        %1361 = vmatpush.bf16.msra.mxu0 %v1352
        %1362 = vmatmul.bf16.gmra.mxu0 %v1349
        %v1363 = vpop.f32.mrf.mxu0
        %v1364 = vadd.f32 0.0, %v1363
        %v1365 = vpop.f32.mrf.mxu0
        %1366 = vdwg.mxu0
        %1367 = vrot.lane.b32.xlu0 %v986, 64
        %v1368 = vpop.permute.xlu0 %1367
        %v1370 = vsel %vm844, %v1238, 0
        %v1373 = vsel %vm1245, %v1368, 0
        %1375 = vmatpush.bf16.msra.mxu0 0
        %1376 = vmatpush.bf16.msra.mxu0 0
        %1377 = vmatpush.bf16.msra.mxu0 0
        %1378 = vmatpush.bf16.msra.mxu0 0
        %1379 = vmatpush.bf16.msra.mxu0 0
        %1380 = vmatpush.bf16.msra.mxu0 0
        %1381 = vmatpush.bf16.msra.mxu0 0
        %1382 = vmatpush.bf16.msra.mxu0 %v1373
        %1383 = vmatmul.bf16.gmra.mxu0 %v1370
        %v1384 = vpop.f32.mrf.mxu0
        %v1385 = vadd.f32 0.0, %v1384
        %v1386 = vpop.f32.mrf.mxu0
        %1387 = vdwg.mxu0
        %1388 = vrot.lane.b32.xlu0 %v1010, 64
        %v1389 = vpop.permute.xlu0 %1388
        %v1391 = vsel %vm844, %v1239, 0
        %v1394 = vsel %vm1245, %v1389, 0
        %1396 = vmatpush.bf16.msra.mxu0 0
        %1397 = vmatpush.bf16.msra.mxu0 0
        %1398 = vmatpush.bf16.msra.mxu0 0
        %1399 = vmatpush.bf16.msra.mxu0 0
        %1400 = vmatpush.bf16.msra.mxu0 0
        %1401 = vmatpush.bf16.msra.mxu0 0
        %1402 = vmatpush.bf16.msra.mxu0 0
        %1403 = vmatpush.bf16.msra.mxu0 %v1394
        %1404 = vmatmul.bf16.gmra.mxu0 %v1391
        %v1405 = vpop.f32.mrf.mxu0
        %v1406 = vadd.f32 0.0, %v1405
        %v1407 = vpop.f32.mrf.mxu0
        %1408 = vdwg.mxu0
        %v1409 = vld [vmem:[%s655] sm:$0xf]
        %v1410 = vld [vmem:[%s655 + $0x4] sm:$0xf]
        %v1411 = vld [vmem:[%s655 + $0x8] sm:$0xf]
        %v1412 = vld [vmem:[%s655 + $0xc] sm:$0xf]
        %v1413 = vld [vmem:[%s658] sm:$0x1]
        %v1414 = vpack.c.bf16 %v1280, %v1259
        %v1416 = vsel %vm844, %v1414, 0
        %v1419 = vsel %vm1245, %v1409, 0
        %1421 = vmatpush.bf16.msra.mxu0 0
        %1422 = vmatpush.bf16.msra.mxu0 0
        %1423 = vmatpush.bf16.msra.mxu0 0
        %1424 = vmatpush.bf16.msra.mxu0 0
        %1425 = vmatpush.bf16.msra.mxu0 0
        %1426 = vmatpush.bf16.msra.mxu0 0
        %1427 = vmatpush.bf16.msra.mxu0 0
        %1428 = vmatpush.bf16.msra.mxu0 %v1419
        %1429 = vmatmul.bf16.gmra.mxu0 %v1416
        %v1430 = vpop.f32.mrf.mxu0
        %v1431 = vadd.f32 0.0, %v1430
        %v1432 = vpop.f32.mrf.mxu0
        %v1433 = vadd.f32 0.0, %v1432
        %1434 = vdwg.mxu0
        %v1436 = vperm.slane %v1413, 0
        %v1438 = vadd.f32 %v1436, %v1431
        %v1439 = vadd.f32 %v1436, %v1433
        %v1440 = vpack.c.bf16 %v1322, %v1301
        %v1442 = vsel %vm844, %v1440, 0
        %v1445 = vsel %vm1245, %v1410, 0
        %1447 = vmatpush.bf16.msra.mxu0 0
        %1448 = vmatpush.bf16.msra.mxu0 0
        %1449 = vmatpush.bf16.msra.mxu0 0
        %1450 = vmatpush.bf16.msra.mxu0 0
        %1451 = vmatpush.bf16.msra.mxu0 0
        %1452 = vmatpush.bf16.msra.mxu0 0
        %1453 = vmatpush.bf16.msra.mxu0 0
        %1454 = vmatpush.bf16.msra.mxu0 %v1445
        %1455 = vmatmul.bf16.gmra.mxu0 %v1442
        %v1456 = vpop.f32.mrf.mxu0
        %v1457 = vadd.f32 0.0, %v1456
        %v1458 = vpop.f32.mrf.mxu0
        %v1459 = vadd.f32 0.0, %v1458
        %1460 = vdwg.mxu0
        %v1461 = vadd.f32 %v1438, %v1457
        %v1462 = vadd.f32 %v1439, %v1459
        %v1463 = vpack.c.bf16 %v1364, %v1343
        %v1465 = vsel %vm844, %v1463, 0
        %v1468 = vsel %vm1245, %v1411, 0
        %1470 = vmatpush.bf16.msra.mxu0 0
        %1471 = vmatpush.bf16.msra.mxu0 0
        %1472 = vmatpush.bf16.msra.mxu0 0
        %1473 = vmatpush.bf16.msra.mxu0 0
        %1474 = vmatpush.bf16.msra.mxu0 0
        %1475 = vmatpush.bf16.msra.mxu0 0
        %1476 = vmatpush.bf16.msra.mxu0 0
        %1477 = vmatpush.bf16.msra.mxu0 %v1468
        %1478 = vmatmul.bf16.gmra.mxu0 %v1465
        %v1479 = vpop.f32.mrf.mxu0
        %v1480 = vadd.f32 0.0, %v1479
        %v1481 = vpop.f32.mrf.mxu0
        %v1482 = vadd.f32 0.0, %v1481
        %1483 = vdwg.mxu0
        %v1484 = vadd.f32 %v1461, %v1480
        %v1485 = vadd.f32 %v1462, %v1482
        %v1486 = vpack.c.bf16 %v1406, %v1385
        %v1488 = vsel %vm844, %v1486, 0
        %v1491 = vsel %vm1245, %v1412, 0
        %1493 = vmatpush.bf16.msra.mxu0 0
        %1494 = vmatpush.bf16.msra.mxu0 0
        %1495 = vmatpush.bf16.msra.mxu0 0
        %1496 = vmatpush.bf16.msra.mxu0 0
        %1497 = vmatpush.bf16.msra.mxu0 0
        %1498 = vmatpush.bf16.msra.mxu0 0
        %1499 = vmatpush.bf16.msra.mxu0 0
        %1500 = vmatpush.bf16.msra.mxu0 %v1491
        %1501 = vmatmul.bf16.gmra.mxu0 %v1488
        %v1502 = vpop.f32.mrf.mxu0
        %v1503 = vadd.f32 0.0, %v1502
        %v1504 = vpop.f32.mrf.mxu0
        %v1505 = vadd.f32 0.0, %v1504
        %1506 = vdwg.mxu0
        %v1507 = vadd.f32 %v1484, %v1503
        %v1508 = vadd.f32 %v1485, %v1505
        %v1509 = vadd.f32 %v770, %v1507
        %v1510 = vadd.f32 %v771, %v1508
        %v1511 = vld [vmem:[%s552] sm:$0x1]
        %v1512 = vld [vmem:[%s677] sm:$0x1]
        %v1513 = vsel %vm793, %v1509, 0.0
        %1514 = vadd.xlane.f32.xlu0 %v1513
        %v1515 = vpop.xlane.xlu0 %1514
        %v1516 = vsel %vm793, %v1510, 0.0
        %1517 = vadd.xlane.f32.xlu0 %v1516
        %v1518 = vpop.xlane.xlu0 %1517
        %v1519 = vrcp.pop 32.0
        %v1520 = vmul.f32 32.0, %v1519
        %v1521 = vsub.f32 1.0, %v1520
        %v1522 = vmul.f32 %v1519, %v1521
        %v1523 = vadd.f32 %v1519, %v1522
        %vm1524 = vweird.f32 %v1519
        %v1525 = vsel %vm1524, %v1519, %v1523
        %v1526 = vmul.f32 %v1515, %v1525
        %v1527 = vmul.f32 %v1518, %v1525
        %v1528 = vsub.f32 %v1509, %v1526
        %v1529 = vsub.f32 %v1510, %v1527
        %v1530 = vmul.f32 %v1528, %v1528
        %v1531 = vmul.f32 %v1529, %v1529
        %v1532 = vsel %vm793, %v1530, 0.0
        %1533 = vadd.xlane.f32.xlu0 %v1532
        %v1534 = vpop.xlane.xlu0 %1533
        %v1535 = vsel %vm793, %v1531, 0.0
        %1536 = vadd.xlane.f32.xlu0 %v1535
        %v1537 = vpop.xlane.xlu0 %1536
        %v1538 = vmul.f32 %v1534, %v1525
        %v1539 = vmul.f32 %v1537, %v1525
        %v1540 = vadd.f32 %v1538, 1e-05
        %v1541 = vadd.f32 %v1539, 1e-05
        %v1542 = vrsqrt.pop %v1540
        %v1543 = vmul.f32 %v1542, %v1540
        %v1544 = vmul.f32 %v1543, %v1542
        %v1545 = vmul.f32 0.5, %v1544
        %v1546 = vsub.f32 1.5, %v1545
        %v1547 = vmul.f32 %v1542, %v1546
        %vm1548 = vweird.f32 %v1540
        %vm1549 = vweird.f32 %v1542
        %vm1550 = vmor %vm1548, %vm1549
        %v1551 = vsel %vm1550, %v1542, %v1547
        %v1552 = vrsqrt.pop %v1541
        %v1553 = vmul.f32 %v1552, %v1541
        %v1554 = vmul.f32 %v1553, %v1552
        %v1555 = vmul.f32 0.5, %v1554
        %v1556 = vsub.f32 1.5, %v1555
        %v1557 = vmul.f32 %v1552, %v1556
        %vm1558 = vweird.f32 %v1541
        %vm1559 = vweird.f32 %v1552
        %vm1560 = vmor %vm1558, %vm1559
        %v1561 = vsel %vm1560, %v1552, %v1557
        %v1562 = vmul.f32 %v1528, %v1551
        %v1563 = vmul.f32 %v1529, %v1561
        %v1565 = vperm.slane %v1511, 0
        %v1567 = vmul.f32 %v1562, %v1565
        %v1568 = vmul.f32 %v1563, %v1565
        %v1570 = vperm.slane %v1512, 0
        %v1572 = vadd.f32 %v1567, %v1570
        %v1573 = vadd.f32 %v1568, %v1570
        %v1574 = vpack.c.bf16 %v1573, %v1572
        %v1575 = vld [vmem:[%s663] sm:$0xf]
        %v1576 = vld [vmem:[%s663 + $0x4] sm:$0xf]
        %v1577 = vld [vmem:[%s663 + $0x8] sm:$0xf]
        %v1578 = vld [vmem:[%s663 + $0xc] sm:$0xf]
        %v1579 = vld [vmem:[%s666] sm:$0x1]
        %v1581 = vperm.slane %v1579, 0
        %v1587 = vunpack.c.l.b16 %v1575
        %v1588 = vunpack.c.l.b16 %v1576
        %v1589 = vunpack.c.l.b16 %v1577
        %v1590 = vunpack.c.l.b16 %v1578
        %v1591 = vpack.c.b16 %v1588, %v1587
        %v1592 = vpack.c.b16 %v1590, %v1589
        %v1596 = vsel %vm793, %v1574, 0
        %1598 = vmatpush.bf16.msra.mxu0 0
        %1599 = vmatpush.bf16.msra.mxu0 0
        %1600 = vmatpush.bf16.msra.mxu0 0
        %1601 = vmatpush.bf16.msra.mxu0 0
        %1602 = vmatpush.bf16.msra.mxu0 0
        %1603 = vmatpush.bf16.msra.mxu0 0
        %1604 = vmatpush.bf16.msra.mxu0 %v1592
        %1605 = vmatpush.bf16.msra.mxu0 %v1591
        %1606 = vmatmul.bf16.gmra.mxu0 %v1596
        %v1607 = vpop.f32.mrf.mxu0
        %v1608 = vadd.f32 %v1581, %v1607
        %v1609 = vpop.f32.mrf.mxu0
        %v1610 = vadd.f32 %v1581, %v1609
        %1611 = vdwg.mxu0
        %v1612 = vmax.f32 %v1608, 0.0
        %v1613 = vmax.f32 %v1610, 0.0
        %v1614 = vpack.c.bf16 %v1613, %v1612
        %v1615 = vld [vmem:[%s671] sm:$0xf]
        %v1616 = vld [vmem:[%s671 + $0x4] sm:$0xf]
        %v1617 = vld [vmem:[%s671 + $0x8] sm:$0xf]
        %v1618 = vld [vmem:[%s671 + $0xc] sm:$0xf]
        %v1619 = vld [vmem:[%s671 + $0x10] sm:$0xf]
        %v1620 = vld [vmem:[%s671 + $0x14] sm:$0xf]
        %v1621 = vld [vmem:[%s671 + $0x18] sm:$0xf]
        %v1622 = vld [vmem:[%s671 + $0x1c] sm:$0xf]
        %v1623 = vld [vmem:[%s674] sm:$0x1]
        %v1625 = vperm.slane %v1623, 0
        %v1635 = vunpack.c.l.b16 %v1615
        %v1636 = vunpack.c.l.b16 %v1616
        %v1637 = vunpack.c.l.b16 %v1617
        %v1638 = vunpack.c.l.b16 %v1618
        %v1639 = vunpack.c.l.b16 %v1619
        %v1640 = vunpack.c.l.b16 %v1620
        %v1641 = vunpack.c.l.b16 %v1621
        %v1642 = vunpack.c.l.b16 %v1622
        %v1643 = vpack.c.b16 %v1636, %v1635
        %v1644 = vpack.c.b16 %v1638, %v1637
        %v1645 = vpack.c.b16 %v1640, %v1639
        %v1646 = vpack.c.b16 %v1642, %v1641
        %vm1651 = vcmask 523264
        %v1653 = vsel %vm1651, %v1614, 0
        %1655 = vmatpush.bf16.msra.mxu0 0
        %1656 = vmatpush.bf16.msra.mxu0 0
        %1657 = vmatpush.bf16.msra.mxu0 0
        %1658 = vmatpush.bf16.msra.mxu0 0
        %1659 = vmatpush.bf16.msra.mxu0 %v1646
        %1660 = vmatpush.bf16.msra.mxu0 %v1645
        %1661 = vmatpush.bf16.msra.mxu0 %v1644
        %1662 = vmatpush.bf16.msra.mxu0 %v1643
        %1663 = vmatmul.bf16.gmra.mxu0 %v1653
        %v1664 = vpop.f32.mrf.mxu0
        %v1665 = vadd.f32 %v1625, %v1664
        %v1666 = vpop.f32.mrf.mxu0
        %v1667 = vadd.f32 %v1625, %v1666
        %1668 = vdwg.mxu0
        %v1669 = vadd.f32 %v1572, %v1665
        %v1670 = vadd.f32 %v1573, %v1667
        %v1671 = vld [vmem:[%s561] sm:$0x1]
        %v1672 = vld [vmem:[%s680] sm:$0x1]
        %v1673 = vsel %vm793, %v1669, 0.0
        %1674 = vadd.xlane.f32.xlu0 %v1673
        %v1675 = vpop.xlane.xlu0 %1674
        %v1676 = vsel %vm793, %v1670, 0.0
        %1677 = vadd.xlane.f32.xlu0 %v1676
        %v1678 = vpop.xlane.xlu0 %1677
        %v1679 = vmul.f32 %v1675, %v1525
        %v1680 = vmul.f32 %v1678, %v1525
        %v1681 = vsub.f32 %v1669, %v1679
        %v1682 = vsub.f32 %v1670, %v1680
        %v1683 = vmul.f32 %v1681, %v1681
        %v1684 = vmul.f32 %v1682, %v1682
        %v1685 = vsel %vm793, %v1683, 0.0
        %1686 = vadd.xlane.f32.xlu0 %v1685
        %v1687 = vpop.xlane.xlu0 %1686
        %v1688 = vsel %vm793, %v1684, 0.0
        %1689 = vadd.xlane.f32.xlu0 %v1688
        %v1690 = vpop.xlane.xlu0 %1689
        %v1691 = vmul.f32 %v1687, %v1525
        %v1692 = vmul.f32 %v1690, %v1525
        %v1693 = vadd.f32 %v1691, 1e-05
        %v1694 = vadd.f32 %v1692, 1e-05
        %v1695 = vrsqrt.pop %v1693
        %v1696 = vmul.f32 %v1695, %v1693
        %v1697 = vmul.f32 %v1696, %v1695
        %v1698 = vmul.f32 0.5, %v1697
        %v1699 = vsub.f32 1.5, %v1698
        %v1700 = vmul.f32 %v1695, %v1699
        %vm1701 = vweird.f32 %v1693
        %vm1702 = vweird.f32 %v1695
        %vm1703 = vmor %vm1701, %vm1702
        %v1704 = vsel %vm1703, %v1695, %v1700
        %v1705 = vrsqrt.pop %v1694
        %v1706 = vmul.f32 %v1705, %v1694
        %v1707 = vmul.f32 %v1706, %v1705
        %v1708 = vmul.f32 0.5, %v1707
        %v1709 = vsub.f32 1.5, %v1708
        %v1710 = vmul.f32 %v1705, %v1709
        %vm1711 = vweird.f32 %v1694
        %vm1712 = vweird.f32 %v1705
        %vm1713 = vmor %vm1711, %vm1712
        %v1714 = vsel %vm1713, %v1705, %v1710
        %v1715 = vmul.f32 %v1681, %v1704
        %v1716 = vmul.f32 %v1682, %v1714
        %v1718 = vperm.slane %v1671, 0
        %v1720 = vmul.f32 %v1715, %v1718
        %v1721 = vmul.f32 %v1716, %v1718
        %v1723 = vperm.slane %v1672, 0
        %v1725 = vadd.f32 %v1720, %v1723
        %v1726 = vadd.f32 %v1721, %v1723
        %1727 = vst.msk [vmem:[#allocation2] sm:$0xff] %vm793, %v1725
        %1728 = vst.msk [vmem:[#allocation2 + $0x8] sm:$0xff] %vm793, %v1726
        %p1729 = scmp.eq.s32.totalorder %s31, 1
        // Predicated region
        $region97: #{tpu_custom_call.1} parent=75 // pred_check
          %p1730 = pneg %p1729
        $region98: #{tpu_custom_call.1} parent=75 // pred_check_branch
          %1732 = sbr.rel (%p1730) target = $region100
        $region99: #{tpu_custom_call.1} parent=75 // pred_region
          %1733 = vst.msk [vmem:[#allocation10] sm:$0xff] %vm793, %v1725
          %1734 = vst.msk [vmem:[#allocation10 + $0x8] sm:$0xff] %vm793, %v1726
        $region100: #{tpu_custom_call.1} parent=75 // pred_fallthru
          _
        // Predicated region
        $region101: #{tpu_custom_call.1} parent=75 // pred_check
          %p1735 = pneg %p398
        $region102: #{tpu_custom_call.1} parent=75 // pred_check_branch
          %1737 = sbr.rel (%p1735) target = $region104
        $region103: #{tpu_custom_call.1} parent=75 // pred_region
          %1739 = vsyncadd [#allocation6], 0
          %s1740 = sshll.u32 [#allocation10], 4
          %s1741 = int_to_ptr.vmem [resolvable:$true] %s1740
          %s1742 = sshll.u32 %s15, 4
          %s1743 = int_to_ptr.hbm [resolvable:$true] %s1742
          %1748 = dma.vmem_to_hbm [thread:$0]  %s1741, 256, %s1743, [#allocation6], 128, 128, 8
        $region104: #{tpu_custom_call.1} parent=75 // pred_fallthru
          _
        // Predicated region
        $region105: #{tpu_custom_call.1} parent=75 // pred_check
          %p1749 = pneg %p398
        $region106: #{tpu_custom_call.1} parent=75 // pred_check_branch
          %1751 = sbr.rel (%p1749) target = $region108
        $region107: #{tpu_custom_call.1} parent=75 // pred_region
          %1753 = dma.done [#allocation6], 256
        $region108: #{tpu_custom_call.1} parent=75 // pred_fallthru
          _
      $region76: #{tpu_custom_call.1} parent=5 // pred_fallthru
        _
      %p1754 = scmp.le.s32.totalorder 2, %s26
      // Predicated region
      $region109: #{tpu_custom_call.1} parent=5 // pred_check
        %p1755 = pneg %p1754
      $region110: #{tpu_custom_call.1} parent=5 // pred_check_branch
        %1757 = sbr.rel (%p1755) target = $region112
      $region111: #{tpu_custom_call.1} parent=5 // pred_region
        %s1758 = ssub.s32 %s26, 2
      $region112: #{tpu_custom_call.1} parent=5 // pred_fallthru
        _
    $region6: #{tpu_custom_call.1} parent=1 // loop_footer
      %s30 = sadd.s32 1, %s26
    $region7: #{tpu_custom_call.1} parent=1 // loop_footer_branch
      %25 = sbr.rel target = $region3
    $region8: #{tpu_custom_call.1} parent=1 // loop_exit
      _
    %1759 = vsyncpa [#allocation5], 1
    %s1760 = scalar_lea.sflag [#allocation5], 1
    %1761 = vsyncpa %s1760, 1
    %1762 = vsyncpa [#allocation8], 1
    %s1763 = scalar_lea.sflag [#allocation8], 1
    %1764 = vsyncpa %s1763, 1
    %1765 = vsyncpa [#allocation6], 1
    %s1766 = scalar_lea.sflag [#allocation6], 1
    %1767 = vsyncpa %s1766, 1
  %1768 = vsyncmov [#allocation3]
  %s1769 = vpop.sfrf %1768
  %p1770 = scmp.eq.s32.totalorder %s1769, 0
  %p1771 = pneg %p1770
  %1773 = shalt.err (%p1771)

</llo_original>
